<compile_context>
chip_gen: v7x
topology: tpu7x:2x2x1
jax: 0.10.0
libtpu: 0.0.40
codegen_flags: <defaults>
</compile_context>

<pallas_src>
import functools

import jax
import jax.numpy as jnp
from jax import lax
from jax.experimental import pallas as pl
from jax.experimental.pallas import tpu as pltpu

EPS = 1e-5
_PAD = 128  # lane-aligned zero padding for flattened spatial shifts


# ------------------------------ fused kernel --------------------------------

def _fused_attention_residual_kernel(
        x_ref,            # (Cp, HW)              f32   input (channels zero-padded to Cp)
        w1_ref,           # (Cout, 9*Cp)          bf16  conv1 weights, BN1 scale folded
        w2sc_ref,         # (Cout, 9*Cout + Cp)   bf16  conv2 + 1x1 shortcut, BN folded
        bias_ref,         # (Cout, 2)             f32   [b1, b2 + bsc]
        caw1_ref,         # (Cr, Cout)            f32   CA FC1
        caw2_ref,         # (Cout, Cr)            f32   CA FC2
        saw_ref,          # (1, 49*8)             f32   SA 7x7 weights (mean,max,0..0 / tap)
        o_ref,            # (Cout, HW)            f32
        *, H, W):
    HW = H * W
    f32 = jnp.float32
    bf16 = jnp.bfloat16

    # column (w) index of every flattened spatial position; masks guard row wrap.
    col = lax.broadcasted_iota(jnp.int32, (1, HW), 1) % W
    wmask = {d: (col + d >= 0) & (col + d < W) for d in range(-3, 4)}

    def pad_flat(v):
        # lane-aligned (128 | HW | 128) concat -> shifted reads land in zeros
        # whenever the flat source index leaves [0, HW)  (vertical OOB).
        z = jnp.zeros((v.shape[0], _PAD), v.dtype)
        return jnp.concatenate([z, v, z], axis=1)

    def im2col(v, k):
        """(C, HW) f32 -> (k*k*C, HW) f32 masked shifted stack (C multiple of 8)."""
        kh = k // 2
        vp = pad_flat(v)
        pieces = []
        for dy in range(k):
            for dx in range(k):
                off = (dy - kh) * W + (dx - kh)
                sh = vp[:, _PAD + off:_PAD + off + HW]
                pieces.append(jnp.where(wmask[dx - kh], sh, 0.0))
        return jnp.concatenate(pieces, axis=0)          # sublane-aligned concat

    x = x_ref[...]                                       # (Cp, HW) f32

    # --- ResidualBlock: conv1 (+BN1 folded) -> relu ---------------------------
    h1 = jnp.dot(w1_ref[...], im2col(x, 3).astype(bf16),
                 preferred_element_type=f32) + bias_ref[:, 0:1]
    h1 = jnp.maximum(h1, 0.0)                            # (Cout, HW) f32

    # --- conv2 (+BN2) and 1x1 shortcut (+BNsc): one K-concatenated matmul -----
    st2 = jnp.concatenate([im2col(h1, 3), x], axis=0).astype(bf16)
    r = jnp.dot(w2sc_ref[...], st2, preferred_element_type=f32) + bias_ref[:, 1:2]
    r = jnp.maximum(r, 0.0)                              # (Cout, HW) f32

    # --- ChannelAttention: both pooled columns through the FCs at once --------
    avg = jnp.mean(r, axis=1, keepdims=True)             # (Cout, 1)
    mx = jnp.max(r, axis=1, keepdims=True)               # (Cout, 1)
    col2 = lax.broadcasted_iota(jnp.int32, (r.shape[0], 2), 1)
    pooled = jnp.where(col2 == 0, avg, mx)               # (Cout, 2), no lane concat
    hfc = jnp.maximum(jnp.dot(caw1_ref[...], pooled, preferred_element_type=f32), 0.0)
    ofc = jnp.dot(caw2_ref[...], hfc, preferred_element_type=f32)   # (Cout, 2)
    catt = jax.nn.sigmoid(ofc[:, 0:1] + ofc[:, 1:2])     # (Cout, 1)
    rc = r * catt                                        # (Cout, HW)

    # --- SpatialAttention: 49-tap stack of (mean,max,0..0), one f32 matmul ----
    row8 = lax.broadcasted_iota(jnp.int32, (8, HW), 0)
    sa_in = jnp.where(row8 == 0, jnp.mean(rc, axis=0, keepdims=True),
                      jnp.where(row8 == 1, jnp.max(rc, axis=0, keepdims=True), 0.0))
    sa_stack = im2col(sa_in, 7)                          # (49*8, HW) f32
    satt = jax.nn.sigmoid(jnp.dot(saw_ref[...], sa_stack,
                                  preferred_element_type=f32))       # (1, HW)

    o_ref[...] = (rc * satt).astype(o_ref.dtype)         # lane-dense store


# -------------------------------- wrapper ------------------------------------

def _fold_bn(bn):
    gamma, beta, mean, var = bn
    s = gamma / jnp.sqrt(var + EPS)
    b = beta - mean * s
    return s.astype(jnp.float32), b.astype(jnp.float32)


def attention_residual_block(x_nchw, p):
    N, Cin, H, W = x_nchw.shape
    Cout = p['w1'].shape[-1]
    Cr = p['caw1'].shape[-1]
    HW = H * W
    Cp = -(-Cin // 8) * 8          # pad input channels so stack pieces are tile-aligned
    assert Cout % 8 == 0, "Cout must be a multiple of 8 for aligned conv2 stacking"

    # NCHW -> (N, Cp, H*W): reshape + zero-pad channels.
    x_flat = jnp.pad(x_nchw.reshape(N, Cin, HW).astype(jnp.float32),
                     ((0, 0), (0, Cp - Cin), (0, 0)))

    s1, b1 = _fold_bn(p['bn1'])
    s2, b2 = _fold_bn(p['bn2'])
    ssc, bsc = _fold_bn(p['bnsc'])

    # conv1: HWIO (3,3,Cin,Cout) -> (Cout, 9, Cp) with BN1 scale folded -> bf16.
    w1_r = jnp.transpose(p['w1'].reshape(9, Cin, Cout), (2, 0, 1)) * s1[:, None, None]
    w1_mat = jnp.pad(w1_r, ((0, 0), (0, 0), (0, Cp - Cin))).reshape(Cout, 9 * Cp)
    w1_mat = w1_mat.astype(jnp.bfloat16)

    # conv2 + 1x1 shortcut fused along K, BN scales folded -> bf16.
    w2_r = jnp.transpose(p['w2'].reshape(9, Cout, Cout), (2, 0, 1)) * s2[:, None, None]
    wsc_r = jnp.pad(p['wsc'].T * ssc[:, None], ((0, 0), (0, Cp - Cin)))
    w2sc_mat = jnp.concatenate([w2_r.reshape(Cout, 9 * Cout), wsc_r],
                               axis=1).astype(jnp.bfloat16)          # (Cout, 9*Cout+Cp)

    # Remaining biases packed into one operand.
    bias = jnp.stack([b1, b2 + bsc], axis=1).astype(jnp.float32)     # (Cout, 2)

    caw1_t = p['caw1'].T.astype(jnp.float32)                         # (Cr, Cout)
    caw2_t = p['caw2'].T.astype(jnp.float32)                         # (Cout, Cr)
    # SA weights: (7,7,2,1) -> per-tap rows [mean, max, 0*6] -> (1, 49*8).
    saw_p = jnp.pad(p['saw'].reshape(49, 2), ((0, 0), (0, 6))).reshape(1, 49 * 8)
    saw_p = saw_p.astype(jnp.float32)

    def bcast(a):
        nd = a.ndim
        return pl.BlockSpec(a.shape, lambda n, _nd=nd: (0,) * _nd)

    flops_img = (2 * HW * (Cout * 9 * Cp + Cout * (9 * Cout + Cp) + 8 * 49)
                 + 2 * 2 * (Cr * Cout + Cout * Cr))
    bytes_acc = int(4 * (x_flat.size + N * Cout * HW + bias.size + caw1_t.size
                         + caw2_t.size + saw_p.size)
                    + 2 * (w1_mat.size + w2sc_mat.size))

    out = pl.pallas_call(
        functools.partial(_fused_attention_residual_kernel, H=H, W=W),
        out_shape=jax.ShapeDtypeStruct((N, Cout, HW), jnp.float32),
        grid=(N,),
        in_specs=[
            pl.BlockSpec((None, Cp, HW), lambda n: (n, 0, 0)),
            bcast(w1_mat), bcast(w2sc_mat), bcast(bias),
            bcast(caw1_t), bcast(caw2_t), bcast(saw_p),
        ],
        out_specs=pl.BlockSpec((None, Cout, HW), lambda n: (n, 0, 0)),
        compiler_params=pltpu.CompilerParams(
            dimension_semantics=("parallel",)),
        cost_estimate=pl.CostEstimate(
            flops=int(N * flops_img),
            transcendentals=int(N * (HW + Cout)),
            bytes_accessed=bytes_acc),
    )(x_flat, w1_mat, w2sc_mat, bias, caw1_t, caw2_t, saw_p)

    return out.reshape(N, Cout, H, W)   # (C, HW) per image == NCHW already


# ------------------------- deterministic parameters --------------------------

def init_params(key, cin, cout, reduction=16):
    cr = max(cout // reduction, 1)
    ks = jax.random.split(key, 9)

    def bn(k):
        k1, k2, k3, k4 = jax.random.split(k, 4)
        gamma = 1.0 + 0.1 * jax.random.normal(k1, (cout,), jnp.float32)
        beta = 0.1 * jax.random.normal(k2, (cout,), jnp.float32)
        mean = 0.1 * jax.random.normal(k3, (cout,), jnp.float32)
        var = jax.random.uniform(k4, (cout,), jnp.float32, minval=0.5, maxval=1.5)
        return gamma, beta, mean, var

    return {
        'w1': jax.random.normal(ks[0], (3, 3, cin, cout), jnp.float32) / jnp.sqrt(9.0 * cin),
        'bn1': bn(ks[1]),
        'w2': jax.random.normal(ks[2], (3, 3, cout, cout), jnp.float32) / jnp.sqrt(9.0 * cout),
        'bn2': bn(ks[3]),
        'wsc': jax.random.normal(ks[4], (cin, cout), jnp.float32) / jnp.sqrt(1.0 * cin),
        'bnsc': bn(ks[5]),
        'caw1': jax.random.normal(ks[6], (cout, cr), jnp.float32) / jnp.sqrt(1.0 * cout),
        'caw2': jax.random.normal(ks[7], (cr, cout), jnp.float32) / jnp.sqrt(1.0 * cr),
        'saw': jax.random.normal(ks[8], (7, 7, 2, 1), jnp.float32) / jnp.sqrt(98.0),
    }


# ------------------------------ pure-JAX reference ---------------------------

def reference(x_nchw, p):
    x = jnp.transpose(x_nchw, (0, 2, 3, 1)).astype(jnp.float32)
    dn = ('NHWC', 'HWIO', 'NHWC')

    def conv(v, w, pad):
        return lax.conv_general_dilated(v, w, (1, 1), [(pad, pad), (pad, pad)],
                                        dimension_numbers=dn,
                                        precision=lax.Precision.HIGHEST)

    def bn(v, prm):
        g, b, m, var = prm
        return (v - m) / jnp.sqrt(var + EPS) * g + b

    h = jax.nn.relu(bn(conv(x, p['w1'], 1), p['bn1']))
    h = bn(conv(h, p['w2'], 1), p['bn2'])
    sc = bn(conv(x, p['wsc'].reshape(1, 1, *p['wsc'].shape), 0), p['bnsc'])
    r = jax.nn.relu(h + sc)

    avg = jnp.mean(r, axis=(1, 2))
    mx = jnp.max(r, axis=(1, 2))

    def fc(v):
        return jax.nn.relu(v @ p['caw1']) @ p['caw2']

    att = jax.nn.sigmoid(fc(avg) + fc(mx))[:, None, None, :]
    rc = r * att

    smap = jnp.stack([jnp.mean(rc, axis=-1), jnp.max(rc, axis=-1)], axis=-1)
    satt = jax.nn.sigmoid(conv(smap, p['saw'], 3))
    out = rc * satt
    return jnp.transpose(out, (0, 3, 1, 2))


# ----------------------------------- main ------------------------------------

if __name__ == "__main__":
    key = jax.random.PRNGKey(0)
    kx, kp = jax.random.split(key)

    N, Cin, Cout, H, W = 2, 4, 16, 16, 16
    x = jax.random.normal(kx, (N, Cin, H, W), jnp.float32)
    params = init_params(kp, Cin, Cout)

    fwd = jax.jit(attention_residual_block)
    out = jax.block_until_ready(fwd(x, params))

    ref = reference(x, params)
    err = float(jnp.max(jnp.abs(out - ref)))
    assert out.shape == (N, Cout, H, W), out.shape
    # bf16 MXU conv operands (f32 accumulation, BN scales folded in f32 before
    # the bf16 cast) vs the f32 HIGHEST-precision reference.
    assert err < 5e-2, f"max abs error too large: {err}"

    print("KERNEL_OK")
</pallas_src>

<mosaic_0001>
module attributes {stable_mosaic.version = 11 : i64} {
  func.func @_fused_attention_residual_kernel(%arg0: i32, %arg1: memref<1x8x256xf32, #tpu.memory_space<vmem>>, %arg2: memref<16x72xbf16, #tpu.memory_space<vmem>>, %arg3: memref<16x152xbf16, #tpu.memory_space<vmem>>, %arg4: memref<16x2xf32, #tpu.memory_space<vmem>>, %arg5: memref<1x16xf32, #tpu.memory_space<vmem>>, %arg6: memref<16x1xf32, #tpu.memory_space<vmem>>, %arg7: memref<1x392xf32, #tpu.memory_space<vmem>>, %arg8: memref<1x16x256xf32, #tpu.memory_space<vmem>>) attributes {dimension_semantics = [#tpu.dimension_semantics<parallel>], iteration_bounds = array<i64: 2>, scalar_prefetch = 0 : i64, scratch_operands = 0 : i64, tpu.core_type = #tpu.core_type<tc>, window_params = [{transform_indices = @transform_0, window_bounds = array<i64: 1, 8, 256>}, {pipeline_mode = #tpu.pipeline_mode<synchronous>, transform_indices = @transform_1, window_bounds = array<i64: 16, 72>}, {pipeline_mode = #tpu.pipeline_mode<synchronous>, transform_indices = @transform_2, window_bounds = array<i64: 16, 152>}, {pipeline_mode = #tpu.pipeline_mode<synchronous>, transform_indices = @transform_3, window_bounds = array<i64: 16, 2>}, {pipeline_mode = #tpu.pipeline_mode<synchronous>, transform_indices = @transform_4, window_bounds = array<i64: 1, 16>}, {pipeline_mode = #tpu.pipeline_mode<synchronous>, transform_indices = @transform_5, window_bounds = array<i64: 16, 1>}, {pipeline_mode = #tpu.pipeline_mode<synchronous>, transform_indices = @transform_6, window_bounds = array<i64: 1, 392>}, {transform_indices = @transform_7, window_bounds = array<i64: 1, 16, 256>}]} {
    %0 = tpu.iota {dimensions = array<i32: 1>} : vector<1x256xi32>
    %c16_i32 = arith.constant 16 : i32
    %c0_i32 = arith.constant 0 : i32
    %1 = arith.cmpi eq, %c16_i32, %c0_i32 : i32
    %c1_i32 = arith.constant 1 : i32
    %2 = arith.select %1, %c1_i32, %c16_i32 : i32
    %3 = vector.broadcast %2 : i32 to vector<1x256xi32>
    %4 = arith.remsi %0, %3 : vector<1x256xi32>
    %c0_i32_0 = arith.constant 0 : i32
    %5 = vector.broadcast %c0_i32_0 : i32 to vector<1x256xi32>
    %6 = arith.cmpi ne, %4, %5 : vector<1x256xi32>
    %c0_i32_1 = arith.constant 0 : i32
    %7 = vector.broadcast %c0_i32_1 : i32 to vector<1x256xi32>
    %8 = arith.cmpi slt, %4, %7 : vector<1x256xi32>
    %c0_i32_2 = arith.constant 0 : i32
    %9 = arith.cmpi slt, %2, %c0_i32_2 : i32
    %10 = vector.broadcast %9 : i1 to vector<1x256xi1>
    %11 = vector.broadcast %10 : vector<1x256xi1> to vector<1x256xi1>
    %12 = arith.xori %8, %11 : vector<1x256xi1>
    %13 = arith.andi %12, %6 : vector<1x256xi1>
    %14 = vector.broadcast %2 : i32 to vector<1x256xi32>
    %15 = arith.addi %4, %14 : vector<1x256xi32>
    %16 = arith.select %13, %15, %4 : vector<1x256xi1>, vector<1x256xi32>
    %c-3_i32 = arith.constant -3 : i32
    %17 = vector.broadcast %c-3_i32 : i32 to vector<1x256xi32>
    %18 = arith.addi %16, %17 : vector<1x256xi32>
    %c0_i32_3 = arith.constant 0 : i32
    %19 = vector.broadcast %c0_i32_3 : i32 to vector<1x256xi32>
    %20 = arith.cmpi sge, %18, %19 : vector<1x256xi32>
    %c-3_i32_4 = arith.constant -3 : i32
    %21 = vector.broadcast %c-3_i32_4 : i32 to vector<1x256xi32>
    %22 = arith.addi %16, %21 : vector<1x256xi32>
    %c16_i32_5 = arith.constant 16 : i32
    %23 = vector.broadcast %c16_i32_5 : i32 to vector<1x256xi32>
    %24 = arith.cmpi slt, %22, %23 : vector<1x256xi32>
    %25 = arith.andi %20, %24 : vector<1x256xi1>
    %c-2_i32 = arith.constant -2 : i32
    %26 = vector.broadcast %c-2_i32 : i32 to vector<1x256xi32>
    %27 = arith.addi %16, %26 : vector<1x256xi32>
    %c0_i32_6 = arith.constant 0 : i32
    %28 = vector.broadcast %c0_i32_6 : i32 to vector<1x256xi32>
    %29 = arith.cmpi sge, %27, %28 : vector<1x256xi32>
    %c-2_i32_7 = arith.constant -2 : i32
    %30 = vector.broadcast %c-2_i32_7 : i32 to vector<1x256xi32>
    %31 = arith.addi %16, %30 : vector<1x256xi32>
    %c16_i32_8 = arith.constant 16 : i32
    %32 = vector.broadcast %c16_i32_8 : i32 to vector<1x256xi32>
    %33 = arith.cmpi slt, %31, %32 : vector<1x256xi32>
    %34 = arith.andi %29, %33 : vector<1x256xi1>
    %c-1_i32 = arith.constant -1 : i32
    %35 = vector.broadcast %c-1_i32 : i32 to vector<1x256xi32>
    %36 = arith.addi %16, %35 : vector<1x256xi32>
    %c0_i32_9 = arith.constant 0 : i32
    %37 = vector.broadcast %c0_i32_9 : i32 to vector<1x256xi32>
    %38 = arith.cmpi sge, %36, %37 : vector<1x256xi32>
    %c-1_i32_10 = arith.constant -1 : i32
    %39 = vector.broadcast %c-1_i32_10 : i32 to vector<1x256xi32>
    %40 = arith.addi %16, %39 : vector<1x256xi32>
    %c16_i32_11 = arith.constant 16 : i32
    %41 = vector.broadcast %c16_i32_11 : i32 to vector<1x256xi32>
    %42 = arith.cmpi slt, %40, %41 : vector<1x256xi32>
    %43 = arith.andi %38, %42 : vector<1x256xi1>
    %c0_i32_12 = arith.constant 0 : i32
    %44 = vector.broadcast %c0_i32_12 : i32 to vector<1x256xi32>
    %45 = arith.addi %16, %44 : vector<1x256xi32>
    %c0_i32_13 = arith.constant 0 : i32
    %46 = vector.broadcast %c0_i32_13 : i32 to vector<1x256xi32>
    %47 = arith.cmpi sge, %45, %46 : vector<1x256xi32>
    %c0_i32_14 = arith.constant 0 : i32
    %48 = vector.broadcast %c0_i32_14 : i32 to vector<1x256xi32>
    %49 = arith.addi %16, %48 : vector<1x256xi32>
    %c16_i32_15 = arith.constant 16 : i32
    %50 = vector.broadcast %c16_i32_15 : i32 to vector<1x256xi32>
    %51 = arith.cmpi slt, %49, %50 : vector<1x256xi32>
    %52 = arith.andi %47, %51 : vector<1x256xi1>
    %c1_i32_16 = arith.constant 1 : i32
    %53 = vector.broadcast %c1_i32_16 : i32 to vector<1x256xi32>
    %54 = arith.addi %16, %53 : vector<1x256xi32>
    %c0_i32_17 = arith.constant 0 : i32
    %55 = vector.broadcast %c0_i32_17 : i32 to vector<1x256xi32>
    %56 = arith.cmpi sge, %54, %55 : vector<1x256xi32>
    %c1_i32_18 = arith.constant 1 : i32
    %57 = vector.broadcast %c1_i32_18 : i32 to vector<1x256xi32>
    %58 = arith.addi %16, %57 : vector<1x256xi32>
    %c16_i32_19 = arith.constant 16 : i32
    %59 = vector.broadcast %c16_i32_19 : i32 to vector<1x256xi32>
    %60 = arith.cmpi slt, %58, %59 : vector<1x256xi32>
    %61 = arith.andi %56, %60 : vector<1x256xi1>
    %c2_i32 = arith.constant 2 : i32
    %62 = vector.broadcast %c2_i32 : i32 to vector<1x256xi32>
    %63 = arith.addi %16, %62 : vector<1x256xi32>
    %c0_i32_20 = arith.constant 0 : i32
    %64 = vector.broadcast %c0_i32_20 : i32 to vector<1x256xi32>
    %65 = arith.cmpi sge, %63, %64 : vector<1x256xi32>
    %c2_i32_21 = arith.constant 2 : i32
    %66 = vector.broadcast %c2_i32_21 : i32 to vector<1x256xi32>
    %67 = arith.addi %16, %66 : vector<1x256xi32>
    %c16_i32_22 = arith.constant 16 : i32
    %68 = vector.broadcast %c16_i32_22 : i32 to vector<1x256xi32>
    %69 = arith.cmpi slt, %67, %68 : vector<1x256xi32>
    %70 = arith.andi %65, %69 : vector<1x256xi1>
    %c3_i32 = arith.constant 3 : i32
    %71 = vector.broadcast %c3_i32 : i32 to vector<1x256xi32>
    %72 = arith.addi %16, %71 : vector<1x256xi32>
    %c0_i32_23 = arith.constant 0 : i32
    %73 = vector.broadcast %c0_i32_23 : i32 to vector<1x256xi32>
    %74 = arith.cmpi sge, %72, %73 : vector<1x256xi32>
    %c3_i32_24 = arith.constant 3 : i32
    %75 = vector.broadcast %c3_i32_24 : i32 to vector<1x256xi32>
    %76 = arith.addi %16, %75 : vector<1x256xi32>
    %c16_i32_25 = arith.constant 16 : i32
    %77 = vector.broadcast %c16_i32_25 : i32 to vector<1x256xi32>
    %78 = arith.cmpi slt, %76, %77 : vector<1x256xi32>
    %79 = arith.andi %74, %78 : vector<1x256xi1>
    %c0 = arith.constant 0 : index
    %c0_26 = arith.constant 0 : index
    %c0_27 = arith.constant 0 : index
    %80 = vector.load %arg1[%c0, %c0_26, %c0_27] : memref<1x8x256xf32, #tpu.memory_space<vmem>>, vector<1x8x256xf32>
    %81 = vector.shape_cast %80 : vector<1x8x256xf32> to vector<8x256xf32>
    %c0_28 = arith.constant 0 : index
    %c0_29 = arith.constant 0 : index
    %82 = vector.load %arg2[%c0_28, %c0_29] : memref<16x72xbf16, #tpu.memory_space<vmem>>, vector<16x72xbf16>
    %cst = arith.constant 0.000000e+00 : f32
    %83 = vector.broadcast %cst : f32 to vector<8x128xf32>
    %84 = tpu.concatenate %83, %81, %83 in 1 : vector<8x128xf32>, vector<8x256xf32>, vector<8x128xf32> -> vector<8x512xf32>
    %85 = vector.extract_strided_slice %84 {offsets = [0, 111], sizes = [8, 256], strides = [1, 1]} : vector<8x512xf32> to vector<8x256xf32>
    %cst_30 = arith.constant 0.000000e+00 : f32
    %86 = vector.shape_cast %43 : vector<1x256xi1> to vector<1x256xi1>
    %87 = vector.broadcast %86 : vector<1x256xi1> to vector<8x256xi1>
    %88 = vector.broadcast %cst_30 : f32 to vector<8x256xf32>
    %89 = arith.select %87, %85, %88 : vector<8x256xi1>, vector<8x256xf32>
    %90 = vector.extract_strided_slice %84 {offsets = [0, 112], sizes = [8, 256], strides = [1, 1]} : vector<8x512xf32> to vector<8x256xf32>
    %cst_31 = arith.constant 0.000000e+00 : f32
    %91 = vector.shape_cast %52 : vector<1x256xi1> to vector<1x256xi1>
    %92 = vector.broadcast %91 : vector<1x256xi1> to vector<8x256xi1>
    %93 = vector.broadcast %cst_31 : f32 to vector<8x256xf32>
    %94 = arith.select %92, %90, %93 : vector<8x256xi1>, vector<8x256xf32>
    %95 = vector.extract_strided_slice %84 {offsets = [0, 113], sizes = [8, 256], strides = [1, 1]} : vector<8x512xf32> to vector<8x256xf32>
    %cst_32 = arith.constant 0.000000e+00 : f32
    %96 = vector.shape_cast %61 : vector<1x256xi1> to vector<1x256xi1>
    %97 = vector.broadcast %96 : vector<1x256xi1> to vector<8x256xi1>
    %98 = vector.broadcast %cst_32 : f32 to vector<8x256xf32>
    %99 = arith.select %97, %95, %98 : vector<8x256xi1>, vector<8x256xf32>
    %100 = vector.extract_strided_slice %84 {offsets = [0, 127], sizes = [8, 256], strides = [1, 1]} : vector<8x512xf32> to vector<8x256xf32>
    %cst_33 = arith.constant 0.000000e+00 : f32
    %101 = vector.shape_cast %43 : vector<1x256xi1> to vector<1x256xi1>
    %102 = vector.broadcast %101 : vector<1x256xi1> to vector<8x256xi1>
    %103 = vector.broadcast %cst_33 : f32 to vector<8x256xf32>
    %104 = arith.select %102, %100, %103 : vector<8x256xi1>, vector<8x256xf32>
    %105 = vector.extract_strided_slice %84 {offsets = [0, 128], sizes = [8, 256], strides = [1, 1]} : vector<8x512xf32> to vector<8x256xf32>
    %cst_34 = arith.constant 0.000000e+00 : f32
    %106 = vector.shape_cast %52 : vector<1x256xi1> to vector<1x256xi1>
    %107 = vector.broadcast %106 : vector<1x256xi1> to vector<8x256xi1>
    %108 = vector.broadcast %cst_34 : f32 to vector<8x256xf32>
    %109 = arith.select %107, %105, %108 : vector<8x256xi1>, vector<8x256xf32>
    %110 = vector.extract_strided_slice %84 {offsets = [0, 129], sizes = [8, 256], strides = [1, 1]} : vector<8x512xf32> to vector<8x256xf32>
    %cst_35 = arith.constant 0.000000e+00 : f32
    %111 = vector.shape_cast %61 : vector<1x256xi1> to vector<1x256xi1>
    %112 = vector.broadcast %111 : vector<1x256xi1> to vector<8x256xi1>
    %113 = vector.broadcast %cst_35 : f32 to vector<8x256xf32>
    %114 = arith.select %112, %110, %113 : vector<8x256xi1>, vector<8x256xf32>
    %115 = vector.extract_strided_slice %84 {offsets = [0, 143], sizes = [8, 256], strides = [1, 1]} : vector<8x512xf32> to vector<8x256xf32>
    %cst_36 = arith.constant 0.000000e+00 : f32
    %116 = vector.shape_cast %43 : vector<1x256xi1> to vector<1x256xi1>
    %117 = vector.broadcast %116 : vector<1x256xi1> to vector<8x256xi1>
    %118 = vector.broadcast %cst_36 : f32 to vector<8x256xf32>
    %119 = arith.select %117, %115, %118 : vector<8x256xi1>, vector<8x256xf32>
    %120 = vector.extract_strided_slice %84 {offsets = [0, 144], sizes = [8, 256], strides = [1, 1]} : vector<8x512xf32> to vector<8x256xf32>
    %cst_37 = arith.constant 0.000000e+00 : f32
    %121 = vector.shape_cast %52 : vector<1x256xi1> to vector<1x256xi1>
    %122 = vector.broadcast %121 : vector<1x256xi1> to vector<8x256xi1>
    %123 = vector.broadcast %cst_37 : f32 to vector<8x256xf32>
    %124 = arith.select %122, %120, %123 : vector<8x256xi1>, vector<8x256xf32>
    %125 = vector.extract_strided_slice %84 {offsets = [0, 145], sizes = [8, 256], strides = [1, 1]} : vector<8x512xf32> to vector<8x256xf32>
    %cst_38 = arith.constant 0.000000e+00 : f32
    %126 = vector.shape_cast %61 : vector<1x256xi1> to vector<1x256xi1>
    %127 = vector.broadcast %126 : vector<1x256xi1> to vector<8x256xi1>
    %128 = vector.broadcast %cst_38 : f32 to vector<8x256xf32>
    %129 = arith.select %127, %125, %128 : vector<8x256xi1>, vector<8x256xf32>
    %130 = tpu.concatenate %89, %94, %99, %104, %109, %114, %119, %124, %129 in 0 : vector<8x256xf32>, vector<8x256xf32>, vector<8x256xf32>, vector<8x256xf32>, vector<8x256xf32>, vector<8x256xf32>, vector<8x256xf32>, vector<8x256xf32>, vector<8x256xf32> -> vector<72x256xf32>
    %131 = arith.truncf %130 : vector<72x256xf32> to vector<72x256xbf16>
    %cst_39 = arith.constant dense<0.000000e+00> : vector<16x256xf32>
    %132 = tpu.matmul %82, %131, %cst_39 {dimension_numbers = #tpu.dot_dimension_numbers<[1], [0], [0], [1], [0, 0, 1, 1], [], []>} : vector<16x72xbf16>, vector<72x256xbf16>, vector<16x256xf32> -> vector<16x256xf32>
    %c0_40 = arith.constant 0 : index
    %c0_41 = arith.constant 0 : index
    %133 = vector.load %arg4[%c0_40, %c0_41] : memref<16x2xf32, #tpu.memory_space<vmem>>, vector<16x1xf32>
    %134 = vector.broadcast %133 : vector<16x1xf32> to vector<16x256xf32>
    %135 = arith.addf %132, %134 : vector<16x256xf32>
    %cst_42 = arith.constant 0.000000e+00 : f32
    %136 = vector.broadcast %cst_42 : f32 to vector<16x256xf32>
    %137 = arith.maximumf %135, %136 : vector<16x256xf32>
    %cst_43 = arith.constant 0.000000e+00 : f32
    %138 = vector.broadcast %cst_43 : f32 to vector<16x128xf32>
    %139 = tpu.concatenate %138, %137, %138 in 1 : vector<16x128xf32>, vector<16x256xf32>, vector<16x128xf32> -> vector<16x512xf32>
    %140 = vector.extract_strided_slice %139 {offsets = [0, 111], sizes = [16, 256], strides = [1, 1]} : vector<16x512xf32> to vector<16x256xf32>
    %cst_44 = arith.constant 0.000000e+00 : f32
    %141 = vector.shape_cast %43 : vector<1x256xi1> to vector<1x256xi1>
    %142 = vector.broadcast %141 : vector<1x256xi1> to vector<16x256xi1>
    %143 = vector.broadcast %cst_44 : f32 to vector<16x256xf32>
    %144 = arith.select %142, %140, %143 : vector<16x256xi1>, vector<16x256xf32>
    %145 = vector.extract_strided_slice %139 {offsets = [0, 112], sizes = [16, 256], strides = [1, 1]} : vector<16x512xf32> to vector<16x256xf32>
    %cst_45 = arith.constant 0.000000e+00 : f32
    %146 = vector.shape_cast %52 : vector<1x256xi1> to vector<1x256xi1>
    %147 = vector.broadcast %146 : vector<1x256xi1> to vector<16x256xi1>
    %148 = vector.broadcast %cst_45 : f32 to vector<16x256xf32>
    %149 = arith.select %147, %145, %148 : vector<16x256xi1>, vector<16x256xf32>
    %150 = vector.extract_strided_slice %139 {offsets = [0, 113], sizes = [16, 256], strides = [1, 1]} : vector<16x512xf32> to vector<16x256xf32>
    %cst_46 = arith.constant 0.000000e+00 : f32
    %151 = vector.shape_cast %61 : vector<1x256xi1> to vector<1x256xi1>
    %152 = vector.broadcast %151 : vector<1x256xi1> to vector<16x256xi1>
    %153 = vector.broadcast %cst_46 : f32 to vector<16x256xf32>
    %154 = arith.select %152, %150, %153 : vector<16x256xi1>, vector<16x256xf32>
    %155 = vector.extract_strided_slice %139 {offsets = [0, 127], sizes = [16, 256], strides = [1, 1]} : vector<16x512xf32> to vector<16x256xf32>
    %cst_47 = arith.constant 0.000000e+00 : f32
    %156 = vector.shape_cast %43 : vector<1x256xi1> to vector<1x256xi1>
    %157 = vector.broadcast %156 : vector<1x256xi1> to vector<16x256xi1>
    %158 = vector.broadcast %cst_47 : f32 to vector<16x256xf32>
    %159 = arith.select %157, %155, %158 : vector<16x256xi1>, vector<16x256xf32>
    %160 = vector.extract_strided_slice %139 {offsets = [0, 128], sizes = [16, 256], strides = [1, 1]} : vector<16x512xf32> to vector<16x256xf32>
    %cst_48 = arith.constant 0.000000e+00 : f32
    %161 = vector.shape_cast %52 : vector<1x256xi1> to vector<1x256xi1>
    %162 = vector.broadcast %161 : vector<1x256xi1> to vector<16x256xi1>
    %163 = vector.broadcast %cst_48 : f32 to vector<16x256xf32>
    %164 = arith.select %162, %160, %163 : vector<16x256xi1>, vector<16x256xf32>
    %165 = vector.extract_strided_slice %139 {offsets = [0, 129], sizes = [16, 256], strides = [1, 1]} : vector<16x512xf32> to vector<16x256xf32>
    %cst_49 = arith.constant 0.000000e+00 : f32
    %166 = vector.shape_cast %61 : vector<1x256xi1> to vector<1x256xi1>
    %167 = vector.broadcast %166 : vector<1x256xi1> to vector<16x256xi1>
    %168 = vector.broadcast %cst_49 : f32 to vector<16x256xf32>
    %169 = arith.select %167, %165, %168 : vector<16x256xi1>, vector<16x256xf32>
    %170 = vector.extract_strided_slice %139 {offsets = [0, 143], sizes = [16, 256], strides = [1, 1]} : vector<16x512xf32> to vector<16x256xf32>
    %cst_50 = arith.constant 0.000000e+00 : f32
    %171 = vector.shape_cast %43 : vector<1x256xi1> to vector<1x256xi1>
    %172 = vector.broadcast %171 : vector<1x256xi1> to vector<16x256xi1>
    %173 = vector.broadcast %cst_50 : f32 to vector<16x256xf32>
    %174 = arith.select %172, %170, %173 : vector<16x256xi1>, vector<16x256xf32>
    %175 = vector.extract_strided_slice %139 {offsets = [0, 144], sizes = [16, 256], strides = [1, 1]} : vector<16x512xf32> to vector<16x256xf32>
    %cst_51 = arith.constant 0.000000e+00 : f32
    %176 = vector.shape_cast %52 : vector<1x256xi1> to vector<1x256xi1>
    %177 = vector.broadcast %176 : vector<1x256xi1> to vector<16x256xi1>
    %178 = vector.broadcast %cst_51 : f32 to vector<16x256xf32>
    %179 = arith.select %177, %175, %178 : vector<16x256xi1>, vector<16x256xf32>
    %180 = vector.extract_strided_slice %139 {offsets = [0, 145], sizes = [16, 256], strides = [1, 1]} : vector<16x512xf32> to vector<16x256xf32>
    %cst_52 = arith.constant 0.000000e+00 : f32
    %181 = vector.shape_cast %61 : vector<1x256xi1> to vector<1x256xi1>
    %182 = vector.broadcast %181 : vector<1x256xi1> to vector<16x256xi1>
    %183 = vector.broadcast %cst_52 : f32 to vector<16x256xf32>
    %184 = arith.select %182, %180, %183 : vector<16x256xi1>, vector<16x256xf32>
    %185 = tpu.concatenate %144, %149, %154, %159, %164, %169, %174, %179, %184 in 0 : vector<16x256xf32>, vector<16x256xf32>, vector<16x256xf32>, vector<16x256xf32>, vector<16x256xf32>, vector<16x256xf32>, vector<16x256xf32>, vector<16x256xf32>, vector<16x256xf32> -> vector<144x256xf32>
    %186 = tpu.concatenate %185, %81 in 0 : vector<144x256xf32>, vector<8x256xf32> -> vector<152x256xf32>
    %187 = arith.truncf %186 : vector<152x256xf32> to vector<152x256xbf16>
    %c0_53 = arith.constant 0 : index
    %c0_54 = arith.constant 0 : index
    %188 = vector.load %arg3[%c0_53, %c0_54] : memref<16x152xbf16, #tpu.memory_space<vmem>>, vector<16x152xbf16>
    %cst_55 = arith.constant dense<0.000000e+00> : vector<16x256xf32>
    %189 = tpu.matmul %188, %187, %cst_55 {dimension_numbers = #tpu.dot_dimension_numbers<[1], [0], [0], [1], [0, 0, 1, 1], [], []>} : vector<16x152xbf16>, vector<152x256xbf16>, vector<16x256xf32> -> vector<16x256xf32>
    %c0_56 = arith.constant 0 : index
    %c1 = arith.constant 1 : index
    %190 = vector.load %arg4[%c0_56, %c1] : memref<16x2xf32, #tpu.memory_space<vmem>>, vector<16x1xf32>
    %191 = vector.broadcast %190 : vector<16x1xf32> to vector<16x256xf32>
    %192 = arith.addf %189, %191 : vector<16x256xf32>
    %cst_57 = arith.constant 0.000000e+00 : f32
    %193 = vector.broadcast %cst_57 : f32 to vector<16x256xf32>
    %194 = arith.maximumf %192, %193 : vector<16x256xf32>
    %cst_58 = arith.constant dense<0.000000e+00> : vector<16xf32>
    %195 = vector.multi_reduction <add>, %194, %cst_58 [1] : vector<16x256xf32> to vector<16xf32>
    %196 = vector.shape_cast %195 : vector<16xf32> to vector<16x1xf32>
    %cst_59 = arith.constant 2.560000e+02 : f32
    %197 = vector.broadcast %cst_59 : f32 to vector<16x1xf32>
    %198 = arith.divf %196, %197 : vector<16x1xf32>
    %cst_60 = arith.constant dense<0xFF800000> : vector<16xf32>
    %199 = vector.multi_reduction <maximumf>, %194, %cst_60 [1] : vector<16x256xf32> to vector<16xf32>
    %200 = vector.shape_cast %199 : vector<16xf32> to vector<16x1xf32>
    %201 = tpu.iota {dimensions = array<i32: 1>} : vector<16x2xi32>
    %c0_i32_61 = arith.constant 0 : i32
    %202 = vector.broadcast %c0_i32_61 : i32 to vector<16x2xi32>
    %203 = arith.cmpi eq, %201, %202 : vector<16x2xi32>
    %204 = vector.shape_cast %198 : vector<16x1xf32> to vector<16x1xf32>
    %205 = vector.broadcast %204 : vector<16x1xf32> to vector<16x2xf32>
    %206 = vector.shape_cast %200 : vector<16x1xf32> to vector<16x1xf32>
    %207 = vector.broadcast %206 : vector<16x1xf32> to vector<16x2xf32>
    %208 = arith.select %203, %205, %207 : vector<16x2xi1>, vector<16x2xf32>
    %c0_62 = arith.constant 0 : index
    %c0_63 = arith.constant 0 : index
    %209 = vector.load %arg5[%c0_62, %c0_63] : memref<1x16xf32, #tpu.memory_space<vmem>>, vector<1x16xf32>
    %cst_64 = arith.constant dense<0.000000e+00> : vector<1x2xf32>
    %210 = tpu.matmul %209, %208, %cst_64 {dimension_numbers = #tpu.dot_dimension_numbers<[1], [0], [0], [1], [0, 0, 1, 1], [], []>} : vector<1x16xf32>, vector<16x2xf32>, vector<1x2xf32> -> vector<1x2xf32>
    %cst_65 = arith.constant 0.000000e+00 : f32
    %211 = vector.broadcast %cst_65 : f32 to vector<1x2xf32>
    %212 = arith.maximumf %210, %211 : vector<1x2xf32>
    %c0_66 = arith.constant 0 : index
    %c0_67 = arith.constant 0 : index
    %213 = vector.load %arg6[%c0_66, %c0_67] : memref<16x1xf32, #tpu.memory_space<vmem>>, vector<16x1xf32>
    %cst_68 = arith.constant dense<0.000000e+00> : vector<16x2xf32>
    %214 = tpu.matmul %213, %212, %cst_68 {dimension_numbers = #tpu.dot_dimension_numbers<[1], [0], [0], [1], [0, 0, 1, 1], [], []>} : vector<16x1xf32>, vector<1x2xf32>, vector<16x2xf32> -> vector<16x2xf32>
    %215 = vector.extract_strided_slice %214 {offsets = [0, 0], sizes = [16, 1], strides = [1, 1]} : vector<16x2xf32> to vector<16x1xf32>
    %216 = vector.extract_strided_slice %214 {offsets = [0, 1], sizes = [16, 1], strides = [1, 1]} : vector<16x2xf32> to vector<16x1xf32>
    %217 = arith.addf %215, %216 : vector<16x1xf32>
    %218 = arith.negf %217 : vector<16x1xf32>
    %219 = math.exp %218 : vector<16x1xf32>
    %cst_69 = arith.constant 1.000000e+00 : f32
    %220 = vector.broadcast %cst_69 : f32 to vector<16x1xf32>
    %221 = arith.addf %220, %219 : vector<16x1xf32>
    %222 = arith.divf %220, %221 : vector<16x1xf32>
    %223 = vector.broadcast %222 : vector<16x1xf32> to vector<16x256xf32>
    %224 = arith.mulf %194, %223 : vector<16x256xf32>
    %225 = tpu.iota {dimensions = array<i32: 0>} : vector<8x256xi32>
    %c0_i32_70 = arith.constant 0 : i32
    %226 = vector.broadcast %c0_i32_70 : i32 to vector<8x256xi32>
    %227 = arith.cmpi eq, %225, %226 : vector<8x256xi32>
    %cst_71 = arith.constant dense<0.000000e+00> : vector<256xf32>
    %228 = vector.multi_reduction <add>, %224, %cst_71 [0] : vector<16x256xf32> to vector<256xf32>
    %229 = vector.shape_cast %228 : vector<256xf32> to vector<1x256xf32>
    %cst_72 = arith.constant 1.600000e+01 : f32
    %230 = vector.broadcast %cst_72 : f32 to vector<1x256xf32>
    %231 = arith.divf %229, %230 : vector<1x256xf32>
    %c1_i32_73 = arith.constant 1 : i32
    %232 = vector.broadcast %c1_i32_73 : i32 to vector<8x256xi32>
    %233 = arith.cmpi eq, %225, %232 : vector<8x256xi32>
    %cst_74 = arith.constant dense<0xFF800000> : vector<256xf32>
    %234 = vector.multi_reduction <maximumf>, %224, %cst_74 [0] : vector<16x256xf32> to vector<256xf32>
    %235 = vector.shape_cast %234 : vector<256xf32> to vector<1x256xf32>
    %cst_75 = arith.constant 0.000000e+00 : f32
    %236 = vector.shape_cast %235 : vector<1x256xf32> to vector<1x256xf32>
    %237 = vector.broadcast %236 : vector<1x256xf32> to vector<8x256xf32>
    %238 = vector.broadcast %cst_75 : f32 to vector<8x256xf32>
    %239 = arith.select %233, %237, %238 : vector<8x256xi1>, vector<8x256xf32>
    %240 = vector.shape_cast %231 : vector<1x256xf32> to vector<1x256xf32>
    %241 = vector.broadcast %240 : vector<1x256xf32> to vector<8x256xf32>
    %242 = arith.select %227, %241, %239 : vector<8x256xi1>, vector<8x256xf32>
    %cst_76 = arith.constant 0.000000e+00 : f32
    %243 = vector.broadcast %cst_76 : f32 to vector<8x128xf32>
    %244 = tpu.concatenate %243, %242, %243 in 1 : vector<8x128xf32>, vector<8x256xf32>, vector<8x128xf32> -> vector<8x512xf32>
    %245 = vector.extract_strided_slice %244 {offsets = [0, 77], sizes = [8, 256], strides = [1, 1]} : vector<8x512xf32> to vector<8x256xf32>
    %cst_77 = arith.constant 0.000000e+00 : f32
    %246 = vector.shape_cast %25 : vector<1x256xi1> to vector<1x256xi1>
    %247 = vector.broadcast %246 : vector<1x256xi1> to vector<8x256xi1>
    %248 = vector.broadcast %cst_77 : f32 to vector<8x256xf32>
    %249 = arith.select %247, %245, %248 : vector<8x256xi1>, vector<8x256xf32>
    %250 = vector.extract_strided_slice %244 {offsets = [0, 78], sizes = [8, 256], strides = [1, 1]} : vector<8x512xf32> to vector<8x256xf32>
    %cst_78 = arith.constant 0.000000e+00 : f32
    %251 = vector.shape_cast %34 : vector<1x256xi1> to vector<1x256xi1>
    %252 = vector.broadcast %251 : vector<1x256xi1> to vector<8x256xi1>
    %253 = vector.broadcast %cst_78 : f32 to vector<8x256xf32>
    %254 = arith.select %252, %250, %253 : vector<8x256xi1>, vector<8x256xf32>
    %255 = vector.extract_strided_slice %244 {offsets = [0, 79], sizes = [8, 256], strides = [1, 1]} : vector<8x512xf32> to vector<8x256xf32>
    %cst_79 = arith.constant 0.000000e+00 : f32
    %256 = vector.shape_cast %43 : vector<1x256xi1> to vector<1x256xi1>
    %257 = vector.broadcast %256 : vector<1x256xi1> to vector<8x256xi1>
    %258 = vector.broadcast %cst_79 : f32 to vector<8x256xf32>
    %259 = arith.select %257, %255, %258 : vector<8x256xi1>, vector<8x256xf32>
    %260 = vector.extract_strided_slice %244 {offsets = [0, 80], sizes = [8, 256], strides = [1, 1]} : vector<8x512xf32> to vector<8x256xf32>
    %cst_80 = arith.constant 0.000000e+00 : f32
    %261 = vector.shape_cast %52 : vector<1x256xi1> to vector<1x256xi1>
    %262 = vector.broadcast %261 : vector<1x256xi1> to vector<8x256xi1>
    %263 = vector.broadcast %cst_80 : f32 to vector<8x256xf32>
    %264 = arith.select %262, %260, %263 : vector<8x256xi1>, vector<8x256xf32>
    %265 = vector.extract_strided_slice %244 {offsets = [0, 81], sizes = [8, 256], strides = [1, 1]} : vector<8x512xf32> to vector<8x256xf32>
    %cst_81 = arith.constant 0.000000e+00 : f32
    %266 = vector.shape_cast %61 : vector<1x256xi1> to vector<1x256xi1>
    %267 = vector.broadcast %266 : vector<1x256xi1> to vector<8x256xi1>
    %268 = vector.broadcast %cst_81 : f32 to vector<8x256xf32>
    %269 = arith.select %267, %265, %268 : vector<8x256xi1>, vector<8x256xf32>
    %270 = vector.extract_strided_slice %244 {offsets = [0, 82], sizes = [8, 256], strides = [1, 1]} : vector<8x512xf32> to vector<8x256xf32>
    %cst_82 = arith.constant 0.000000e+00 : f32
    %271 = vector.shape_cast %70 : vector<1x256xi1> to vector<1x256xi1>
    %272 = vector.broadcast %271 : vector<1x256xi1> to vector<8x256xi1>
    %273 = vector.broadcast %cst_82 : f32 to vector<8x256xf32>
    %274 = arith.select %272, %270, %273 : vector<8x256xi1>, vector<8x256xf32>
    %275 = vector.extract_strided_slice %244 {offsets = [0, 83], sizes = [8, 256], strides = [1, 1]} : vector<8x512xf32> to vector<8x256xf32>
    %cst_83 = arith.constant 0.000000e+00 : f32
    %276 = vector.shape_cast %79 : vector<1x256xi1> to vector<1x256xi1>
    %277 = vector.broadcast %276 : vector<1x256xi1> to vector<8x256xi1>
    %278 = vector.broadcast %cst_83 : f32 to vector<8x256xf32>
    %279 = arith.select %277, %275, %278 : vector<8x256xi1>, vector<8x256xf32>
    %280 = vector.extract_strided_slice %244 {offsets = [0, 93], sizes = [8, 256], strides = [1, 1]} : vector<8x512xf32> to vector<8x256xf32>
    %cst_84 = arith.constant 0.000000e+00 : f32
    %281 = vector.shape_cast %25 : vector<1x256xi1> to vector<1x256xi1>
    %282 = vector.broadcast %281 : vector<1x256xi1> to vector<8x256xi1>
    %283 = vector.broadcast %cst_84 : f32 to vector<8x256xf32>
    %284 = arith.select %282, %280, %283 : vector<8x256xi1>, vector<8x256xf32>
    %285 = vector.extract_strided_slice %244 {offsets = [0, 94], sizes = [8, 256], strides = [1, 1]} : vector<8x512xf32> to vector<8x256xf32>
    %cst_85 = arith.constant 0.000000e+00 : f32
    %286 = vector.shape_cast %34 : vector<1x256xi1> to vector<1x256xi1>
    %287 = vector.broadcast %286 : vector<1x256xi1> to vector<8x256xi1>
    %288 = vector.broadcast %cst_85 : f32 to vector<8x256xf32>
    %289 = arith.select %287, %285, %288 : vector<8x256xi1>, vector<8x256xf32>
    %290 = vector.extract_strided_slice %244 {offsets = [0, 95], sizes = [8, 256], strides = [1, 1]} : vector<8x512xf32> to vector<8x256xf32>
    %cst_86 = arith.constant 0.000000e+00 : f32
    %291 = vector.shape_cast %43 : vector<1x256xi1> to vector<1x256xi1>
    %292 = vector.broadcast %291 : vector<1x256xi1> to vector<8x256xi1>
    %293 = vector.broadcast %cst_86 : f32 to vector<8x256xf32>
    %294 = arith.select %292, %290, %293 : vector<8x256xi1>, vector<8x256xf32>
    %295 = vector.extract_strided_slice %244 {offsets = [0, 96], sizes = [8, 256], strides = [1, 1]} : vector<8x512xf32> to vector<8x256xf32>
    %cst_87 = arith.constant 0.000000e+00 : f32
    %296 = vector.shape_cast %52 : vector<1x256xi1> to vector<1x256xi1>
    %297 = vector.broadcast %296 : vector<1x256xi1> to vector<8x256xi1>
    %298 = vector.broadcast %cst_87 : f32 to vector<8x256xf32>
    %299 = arith.select %297, %295, %298 : vector<8x256xi1>, vector<8x256xf32>
    %300 = vector.extract_strided_slice %244 {offsets = [0, 97], sizes = [8, 256], strides = [1, 1]} : vector<8x512xf32> to vector<8x256xf32>
    %cst_88 = arith.constant 0.000000e+00 : f32
    %301 = vector.shape_cast %61 : vector<1x256xi1> to vector<1x256xi1>
    %302 = vector.broadcast %301 : vector<1x256xi1> to vector<8x256xi1>
    %303 = vector.broadcast %cst_88 : f32 to vector<8x256xf32>
    %304 = arith.select %302, %300, %303 : vector<8x256xi1>, vector<8x256xf32>
    %305 = vector.extract_strided_slice %244 {offsets = [0, 98], sizes = [8, 256], strides = [1, 1]} : vector<8x512xf32> to vector<8x256xf32>
    %cst_89 = arith.constant 0.000000e+00 : f32
    %306 = vector.shape_cast %70 : vector<1x256xi1> to vector<1x256xi1>
    %307 = vector.broadcast %306 : vector<1x256xi1> to vector<8x256xi1>
    %308 = vector.broadcast %cst_89 : f32 to vector<8x256xf32>
    %309 = arith.select %307, %305, %308 : vector<8x256xi1>, vector<8x256xf32>
    %310 = vector.extract_strided_slice %244 {offsets = [0, 99], sizes = [8, 256], strides = [1, 1]} : vector<8x512xf32> to vector<8x256xf32>
    %cst_90 = arith.constant 0.000000e+00 : f32
    %311 = vector.shape_cast %79 : vector<1x256xi1> to vector<1x256xi1>
    %312 = vector.broadcast %311 : vector<1x256xi1> to vector<8x256xi1>
    %313 = vector.broadcast %cst_90 : f32 to vector<8x256xf32>
    %314 = arith.select %312, %310, %313 : vector<8x256xi1>, vector<8x256xf32>
    %315 = vector.extract_strided_slice %244 {offsets = [0, 109], sizes = [8, 256], strides = [1, 1]} : vector<8x512xf32> to vector<8x256xf32>
    %cst_91 = arith.constant 0.000000e+00 : f32
    %316 = vector.shape_cast %25 : vector<1x256xi1> to vector<1x256xi1>
    %317 = vector.broadcast %316 : vector<1x256xi1> to vector<8x256xi1>
    %318 = vector.broadcast %cst_91 : f32 to vector<8x256xf32>
    %319 = arith.select %317, %315, %318 : vector<8x256xi1>, vector<8x256xf32>
    %320 = vector.extract_strided_slice %244 {offsets = [0, 110], sizes = [8, 256], strides = [1, 1]} : vector<8x512xf32> to vector<8x256xf32>
    %cst_92 = arith.constant 0.000000e+00 : f32
    %321 = vector.shape_cast %34 : vector<1x256xi1> to vector<1x256xi1>
    %322 = vector.broadcast %321 : vector<1x256xi1> to vector<8x256xi1>
    %323 = vector.broadcast %cst_92 : f32 to vector<8x256xf32>
    %324 = arith.select %322, %320, %323 : vector<8x256xi1>, vector<8x256xf32>
    %325 = vector.extract_strided_slice %244 {offsets = [0, 111], sizes = [8, 256], strides = [1, 1]} : vector<8x512xf32> to vector<8x256xf32>
    %cst_93 = arith.constant 0.000000e+00 : f32
    %326 = vector.shape_cast %43 : vector<1x256xi1> to vector<1x256xi1>
    %327 = vector.broadcast %326 : vector<1x256xi1> to vector<8x256xi1>
    %328 = vector.broadcast %cst_93 : f32 to vector<8x256xf32>
    %329 = arith.select %327, %325, %328 : vector<8x256xi1>, vector<8x256xf32>
    %330 = vector.extract_strided_slice %244 {offsets = [0, 112], sizes = [8, 256], strides = [1, 1]} : vector<8x512xf32> to vector<8x256xf32>
    %cst_94 = arith.constant 0.000000e+00 : f32
    %331 = vector.shape_cast %52 : vector<1x256xi1> to vector<1x256xi1>
    %332 = vector.broadcast %331 : vector<1x256xi1> to vector<8x256xi1>
    %333 = vector.broadcast %cst_94 : f32 to vector<8x256xf32>
    %334 = arith.select %332, %330, %333 : vector<8x256xi1>, vector<8x256xf32>
    %335 = vector.extract_strided_slice %244 {offsets = [0, 113], sizes = [8, 256], strides = [1, 1]} : vector<8x512xf32> to vector<8x256xf32>
    %cst_95 = arith.constant 0.000000e+00 : f32
    %336 = vector.shape_cast %61 : vector<1x256xi1> to vector<1x256xi1>
    %337 = vector.broadcast %336 : vector<1x256xi1> to vector<8x256xi1>
    %338 = vector.broadcast %cst_95 : f32 to vector<8x256xf32>
    %339 = arith.select %337, %335, %338 : vector<8x256xi1>, vector<8x256xf32>
    %340 = vector.extract_strided_slice %244 {offsets = [0, 114], sizes = [8, 256], strides = [1, 1]} : vector<8x512xf32> to vector<8x256xf32>
    %cst_96 = arith.constant 0.000000e+00 : f32
    %341 = vector.shape_cast %70 : vector<1x256xi1> to vector<1x256xi1>
    %342 = vector.broadcast %341 : vector<1x256xi1> to vector<8x256xi1>
    %343 = vector.broadcast %cst_96 : f32 to vector<8x256xf32>
    %344 = arith.select %342, %340, %343 : vector<8x256xi1>, vector<8x256xf32>
    %345 = vector.extract_strided_slice %244 {offsets = [0, 115], sizes = [8, 256], strides = [1, 1]} : vector<8x512xf32> to vector<8x256xf32>
    %cst_97 = arith.constant 0.000000e+00 : f32
    %346 = vector.shape_cast %79 : vector<1x256xi1> to vector<1x256xi1>
    %347 = vector.broadcast %346 : vector<1x256xi1> to vector<8x256xi1>
    %348 = vector.broadcast %cst_97 : f32 to vector<8x256xf32>
    %349 = arith.select %347, %345, %348 : vector<8x256xi1>, vector<8x256xf32>
    %350 = vector.extract_strided_slice %244 {offsets = [0, 125], sizes = [8, 256], strides = [1, 1]} : vector<8x512xf32> to vector<8x256xf32>
    %cst_98 = arith.constant 0.000000e+00 : f32
    %351 = vector.shape_cast %25 : vector<1x256xi1> to vector<1x256xi1>
    %352 = vector.broadcast %351 : vector<1x256xi1> to vector<8x256xi1>
    %353 = vector.broadcast %cst_98 : f32 to vector<8x256xf32>
    %354 = arith.select %352, %350, %353 : vector<8x256xi1>, vector<8x256xf32>
    %355 = vector.extract_strided_slice %244 {offsets = [0, 126], sizes = [8, 256], strides = [1, 1]} : vector<8x512xf32> to vector<8x256xf32>
    %cst_99 = arith.constant 0.000000e+00 : f32
    %356 = vector.shape_cast %34 : vector<1x256xi1> to vector<1x256xi1>
    %357 = vector.broadcast %356 : vector<1x256xi1> to vector<8x256xi1>
    %358 = vector.broadcast %cst_99 : f32 to vector<8x256xf32>
    %359 = arith.select %357, %355, %358 : vector<8x256xi1>, vector<8x256xf32>
    %360 = vector.extract_strided_slice %244 {offsets = [0, 127], sizes = [8, 256], strides = [1, 1]} : vector<8x512xf32> to vector<8x256xf32>
    %cst_100 = arith.constant 0.000000e+00 : f32
    %361 = vector.shape_cast %43 : vector<1x256xi1> to vector<1x256xi1>
    %362 = vector.broadcast %361 : vector<1x256xi1> to vector<8x256xi1>
    %363 = vector.broadcast %cst_100 : f32 to vector<8x256xf32>
    %364 = arith.select %362, %360, %363 : vector<8x256xi1>, vector<8x256xf32>
    %365 = vector.extract_strided_slice %244 {offsets = [0, 128], sizes = [8, 256], strides = [1, 1]} : vector<8x512xf32> to vector<8x256xf32>
    %cst_101 = arith.constant 0.000000e+00 : f32
    %366 = vector.shape_cast %52 : vector<1x256xi1> to vector<1x256xi1>
    %367 = vector.broadcast %366 : vector<1x256xi1> to vector<8x256xi1>
    %368 = vector.broadcast %cst_101 : f32 to vector<8x256xf32>
    %369 = arith.select %367, %365, %368 : vector<8x256xi1>, vector<8x256xf32>
    %370 = vector.extract_strided_slice %244 {offsets = [0, 129], sizes = [8, 256], strides = [1, 1]} : vector<8x512xf32> to vector<8x256xf32>
    %cst_102 = arith.constant 0.000000e+00 : f32
    %371 = vector.shape_cast %61 : vector<1x256xi1> to vector<1x256xi1>
    %372 = vector.broadcast %371 : vector<1x256xi1> to vector<8x256xi1>
    %373 = vector.broadcast %cst_102 : f32 to vector<8x256xf32>
    %374 = arith.select %372, %370, %373 : vector<8x256xi1>, vector<8x256xf32>
    %375 = vector.extract_strided_slice %244 {offsets = [0, 130], sizes = [8, 256], strides = [1, 1]} : vector<8x512xf32> to vector<8x256xf32>
    %cst_103 = arith.constant 0.000000e+00 : f32
    %376 = vector.shape_cast %70 : vector<1x256xi1> to vector<1x256xi1>
    %377 = vector.broadcast %376 : vector<1x256xi1> to vector<8x256xi1>
    %378 = vector.broadcast %cst_103 : f32 to vector<8x256xf32>
    %379 = arith.select %377, %375, %378 : vector<8x256xi1>, vector<8x256xf32>
    %380 = vector.extract_strided_slice %244 {offsets = [0, 131], sizes = [8, 256], strides = [1, 1]} : vector<8x512xf32> to vector<8x256xf32>
    %cst_104 = arith.constant 0.000000e+00 : f32
    %381 = vector.shape_cast %79 : vector<1x256xi1> to vector<1x256xi1>
    %382 = vector.broadcast %381 : vector<1x256xi1> to vector<8x256xi1>
    %383 = vector.broadcast %cst_104 : f32 to vector<8x256xf32>
    %384 = arith.select %382, %380, %383 : vector<8x256xi1>, vector<8x256xf32>
    %385 = vector.extract_strided_slice %244 {offsets = [0, 141], sizes = [8, 256], strides = [1, 1]} : vector<8x512xf32> to vector<8x256xf32>
    %cst_105 = arith.constant 0.000000e+00 : f32
    %386 = vector.shape_cast %25 : vector<1x256xi1> to vector<1x256xi1>
    %387 = vector.broadcast %386 : vector<1x256xi1> to vector<8x256xi1>
    %388 = vector.broadcast %cst_105 : f32 to vector<8x256xf32>
    %389 = arith.select %387, %385, %388 : vector<8x256xi1>, vector<8x256xf32>
    %390 = vector.extract_strided_slice %244 {offsets = [0, 142], sizes = [8, 256], strides = [1, 1]} : vector<8x512xf32> to vector<8x256xf32>
    %cst_106 = arith.constant 0.000000e+00 : f32
    %391 = vector.shape_cast %34 : vector<1x256xi1> to vector<1x256xi1>
    %392 = vector.broadcast %391 : vector<1x256xi1> to vector<8x256xi1>
    %393 = vector.broadcast %cst_106 : f32 to vector<8x256xf32>
    %394 = arith.select %392, %390, %393 : vector<8x256xi1>, vector<8x256xf32>
    %395 = vector.extract_strided_slice %244 {offsets = [0, 143], sizes = [8, 256], strides = [1, 1]} : vector<8x512xf32> to vector<8x256xf32>
    %cst_107 = arith.constant 0.000000e+00 : f32
    %396 = vector.shape_cast %43 : vector<1x256xi1> to vector<1x256xi1>
    %397 = vector.broadcast %396 : vector<1x256xi1> to vector<8x256xi1>
    %398 = vector.broadcast %cst_107 : f32 to vector<8x256xf32>
    %399 = arith.select %397, %395, %398 : vector<8x256xi1>, vector<8x256xf32>
    %400 = vector.extract_strided_slice %244 {offsets = [0, 144], sizes = [8, 256], strides = [1, 1]} : vector<8x512xf32> to vector<8x256xf32>
    %cst_108 = arith.constant 0.000000e+00 : f32
    %401 = vector.shape_cast %52 : vector<1x256xi1> to vector<1x256xi1>
    %402 = vector.broadcast %401 : vector<1x256xi1> to vector<8x256xi1>
    %403 = vector.broadcast %cst_108 : f32 to vector<8x256xf32>
    %404 = arith.select %402, %400, %403 : vector<8x256xi1>, vector<8x256xf32>
    %405 = vector.extract_strided_slice %244 {offsets = [0, 145], sizes = [8, 256], strides = [1, 1]} : vector<8x512xf32> to vector<8x256xf32>
    %cst_109 = arith.constant 0.000000e+00 : f32
    %406 = vector.shape_cast %61 : vector<1x256xi1> to vector<1x256xi1>
    %407 = vector.broadcast %406 : vector<1x256xi1> to vector<8x256xi1>
    %408 = vector.broadcast %cst_109 : f32 to vector<8x256xf32>
    %409 = arith.select %407, %405, %408 : vector<8x256xi1>, vector<8x256xf32>
    %410 = vector.extract_strided_slice %244 {offsets = [0, 146], sizes = [8, 256], strides = [1, 1]} : vector<8x512xf32> to vector<8x256xf32>
    %cst_110 = arith.constant 0.000000e+00 : f32
    %411 = vector.shape_cast %70 : vector<1x256xi1> to vector<1x256xi1>
    %412 = vector.broadcast %411 : vector<1x256xi1> to vector<8x256xi1>
    %413 = vector.broadcast %cst_110 : f32 to vector<8x256xf32>
    %414 = arith.select %412, %410, %413 : vector<8x256xi1>, vector<8x256xf32>
    %415 = vector.extract_strided_slice %244 {offsets = [0, 147], sizes = [8, 256], strides = [1, 1]} : vector<8x512xf32> to vector<8x256xf32>
    %cst_111 = arith.constant 0.000000e+00 : f32
    %416 = vector.shape_cast %79 : vector<1x256xi1> to vector<1x256xi1>
    %417 = vector.broadcast %416 : vector<1x256xi1> to vector<8x256xi1>
    %418 = vector.broadcast %cst_111 : f32 to vector<8x256xf32>
    %419 = arith.select %417, %415, %418 : vector<8x256xi1>, vector<8x256xf32>
    %420 = vector.extract_strided_slice %244 {offsets = [0, 157], sizes = [8, 256], strides = [1, 1]} : vector<8x512xf32> to vector<8x256xf32>
    %cst_112 = arith.constant 0.000000e+00 : f32
    %421 = vector.shape_cast %25 : vector<1x256xi1> to vector<1x256xi1>
    %422 = vector.broadcast %421 : vector<1x256xi1> to vector<8x256xi1>
    %423 = vector.broadcast %cst_112 : f32 to vector<8x256xf32>
    %424 = arith.select %422, %420, %423 : vector<8x256xi1>, vector<8x256xf32>
    %425 = vector.extract_strided_slice %244 {offsets = [0, 158], sizes = [8, 256], strides = [1, 1]} : vector<8x512xf32> to vector<8x256xf32>
    %cst_113 = arith.constant 0.000000e+00 : f32
    %426 = vector.shape_cast %34 : vector<1x256xi1> to vector<1x256xi1>
    %427 = vector.broadcast %426 : vector<1x256xi1> to vector<8x256xi1>
    %428 = vector.broadcast %cst_113 : f32 to vector<8x256xf32>
    %429 = arith.select %427, %425, %428 : vector<8x256xi1>, vector<8x256xf32>
    %430 = vector.extract_strided_slice %244 {offsets = [0, 159], sizes = [8, 256], strides = [1, 1]} : vector<8x512xf32> to vector<8x256xf32>
    %cst_114 = arith.constant 0.000000e+00 : f32
    %431 = vector.shape_cast %43 : vector<1x256xi1> to vector<1x256xi1>
    %432 = vector.broadcast %431 : vector<1x256xi1> to vector<8x256xi1>
    %433 = vector.broadcast %cst_114 : f32 to vector<8x256xf32>
    %434 = arith.select %432, %430, %433 : vector<8x256xi1>, vector<8x256xf32>
    %435 = vector.extract_strided_slice %244 {offsets = [0, 160], sizes = [8, 256], strides = [1, 1]} : vector<8x512xf32> to vector<8x256xf32>
    %cst_115 = arith.constant 0.000000e+00 : f32
    %436 = vector.shape_cast %52 : vector<1x256xi1> to vector<1x256xi1>
    %437 = vector.broadcast %436 : vector<1x256xi1> to vector<8x256xi1>
    %438 = vector.broadcast %cst_115 : f32 to vector<8x256xf32>
    %439 = arith.select %437, %435, %438 : vector<8x256xi1>, vector<8x256xf32>
    %440 = vector.extract_strided_slice %244 {offsets = [0, 161], sizes = [8, 256], strides = [1, 1]} : vector<8x512xf32> to vector<8x256xf32>
    %cst_116 = arith.constant 0.000000e+00 : f32
    %441 = vector.shape_cast %61 : vector<1x256xi1> to vector<1x256xi1>
    %442 = vector.broadcast %441 : vector<1x256xi1> to vector<8x256xi1>
    %443 = vector.broadcast %cst_116 : f32 to vector<8x256xf32>
    %444 = arith.select %442, %440, %443 : vector<8x256xi1>, vector<8x256xf32>
    %445 = vector.extract_strided_slice %244 {offsets = [0, 162], sizes = [8, 256], strides = [1, 1]} : vector<8x512xf32> to vector<8x256xf32>
    %cst_117 = arith.constant 0.000000e+00 : f32
    %446 = vector.shape_cast %70 : vector<1x256xi1> to vector<1x256xi1>
    %447 = vector.broadcast %446 : vector<1x256xi1> to vector<8x256xi1>
    %448 = vector.broadcast %cst_117 : f32 to vector<8x256xf32>
    %449 = arith.select %447, %445, %448 : vector<8x256xi1>, vector<8x256xf32>
    %450 = vector.extract_strided_slice %244 {offsets = [0, 163], sizes = [8, 256], strides = [1, 1]} : vector<8x512xf32> to vector<8x256xf32>
    %cst_118 = arith.constant 0.000000e+00 : f32
    %451 = vector.shape_cast %79 : vector<1x256xi1> to vector<1x256xi1>
    %452 = vector.broadcast %451 : vector<1x256xi1> to vector<8x256xi1>
    %453 = vector.broadcast %cst_118 : f32 to vector<8x256xf32>
    %454 = arith.select %452, %450, %453 : vector<8x256xi1>, vector<8x256xf32>
    %455 = vector.extract_strided_slice %244 {offsets = [0, 173], sizes = [8, 256], strides = [1, 1]} : vector<8x512xf32> to vector<8x256xf32>
    %cst_119 = arith.constant 0.000000e+00 : f32
    %456 = vector.shape_cast %25 : vector<1x256xi1> to vector<1x256xi1>
    %457 = vector.broadcast %456 : vector<1x256xi1> to vector<8x256xi1>
    %458 = vector.broadcast %cst_119 : f32 to vector<8x256xf32>
    %459 = arith.select %457, %455, %458 : vector<8x256xi1>, vector<8x256xf32>
    %460 = vector.extract_strided_slice %244 {offsets = [0, 174], sizes = [8, 256], strides = [1, 1]} : vector<8x512xf32> to vector<8x256xf32>
    %cst_120 = arith.constant 0.000000e+00 : f32
    %461 = vector.shape_cast %34 : vector<1x256xi1> to vector<1x256xi1>
    %462 = vector.broadcast %461 : vector<1x256xi1> to vector<8x256xi1>
    %463 = vector.broadcast %cst_120 : f32 to vector<8x256xf32>
    %464 = arith.select %462, %460, %463 : vector<8x256xi1>, vector<8x256xf32>
    %465 = vector.extract_strided_slice %244 {offsets = [0, 175], sizes = [8, 256], strides = [1, 1]} : vector<8x512xf32> to vector<8x256xf32>
    %cst_121 = arith.constant 0.000000e+00 : f32
    %466 = vector.shape_cast %43 : vector<1x256xi1> to vector<1x256xi1>
    %467 = vector.broadcast %466 : vector<1x256xi1> to vector<8x256xi1>
    %468 = vector.broadcast %cst_121 : f32 to vector<8x256xf32>
    %469 = arith.select %467, %465, %468 : vector<8x256xi1>, vector<8x256xf32>
    %470 = vector.extract_strided_slice %244 {offsets = [0, 176], sizes = [8, 256], strides = [1, 1]} : vector<8x512xf32> to vector<8x256xf32>
    %cst_122 = arith.constant 0.000000e+00 : f32
    %471 = vector.shape_cast %52 : vector<1x256xi1> to vector<1x256xi1>
    %472 = vector.broadcast %471 : vector<1x256xi1> to vector<8x256xi1>
    %473 = vector.broadcast %cst_122 : f32 to vector<8x256xf32>
    %474 = arith.select %472, %470, %473 : vector<8x256xi1>, vector<8x256xf32>
    %475 = vector.extract_strided_slice %244 {offsets = [0, 177], sizes = [8, 256], strides = [1, 1]} : vector<8x512xf32> to vector<8x256xf32>
    %cst_123 = arith.constant 0.000000e+00 : f32
    %476 = vector.shape_cast %61 : vector<1x256xi1> to vector<1x256xi1>
    %477 = vector.broadcast %476 : vector<1x256xi1> to vector<8x256xi1>
    %478 = vector.broadcast %cst_123 : f32 to vector<8x256xf32>
    %479 = arith.select %477, %475, %478 : vector<8x256xi1>, vector<8x256xf32>
    %480 = vector.extract_strided_slice %244 {offsets = [0, 178], sizes = [8, 256], strides = [1, 1]} : vector<8x512xf32> to vector<8x256xf32>
    %cst_124 = arith.constant 0.000000e+00 : f32
    %481 = vector.shape_cast %70 : vector<1x256xi1> to vector<1x256xi1>
    %482 = vector.broadcast %481 : vector<1x256xi1> to vector<8x256xi1>
    %483 = vector.broadcast %cst_124 : f32 to vector<8x256xf32>
    %484 = arith.select %482, %480, %483 : vector<8x256xi1>, vector<8x256xf32>
    %485 = vector.extract_strided_slice %244 {offsets = [0, 179], sizes = [8, 256], strides = [1, 1]} : vector<8x512xf32> to vector<8x256xf32>
    %cst_125 = arith.constant 0.000000e+00 : f32
    %486 = vector.shape_cast %79 : vector<1x256xi1> to vector<1x256xi1>
    %487 = vector.broadcast %486 : vector<1x256xi1> to vector<8x256xi1>
    %488 = vector.broadcast %cst_125 : f32 to vector<8x256xf32>
    %489 = arith.select %487, %485, %488 : vector<8x256xi1>, vector<8x256xf32>
    %490 = tpu.concatenate %249, %254, %259, %264, %269, %274, %279, %284, %289, %294, %299, %304, %309, %314, %319, %324 in 0 : vector<8x256xf32>, vector<8x256xf32>, vector<8x256xf32>, vector<8x256xf32>, vector<8x256xf32>, vector<8x256xf32>, vector<8x256xf32>, vector<8x256xf32>, vector<8x256xf32>, vector<8x256xf32>, vector<8x256xf32>, vector<8x256xf32>, vector<8x256xf32>, vector<8x256xf32>, vector<8x256xf32>, vector<8x256xf32> -> vector<128x256xf32>
    %491 = tpu.concatenate %329, %334, %339, %344, %349, %354, %359, %364, %369, %374, %379, %384, %389, %394, %399, %404 in 0 : vector<8x256xf32>, vector<8x256xf32>, vector<8x256xf32>, vector<8x256xf32>, vector<8x256xf32>, vector<8x256xf32>, vector<8x256xf32>, vector<8x256xf32>, vector<8x256xf32>, vector<8x256xf32>, vector<8x256xf32>, vector<8x256xf32>, vector<8x256xf32>, vector<8x256xf32>, vector<8x256xf32>, vector<8x256xf32> -> vector<128x256xf32>
    %492 = tpu.concatenate %409, %414, %419, %424, %429, %434, %439, %444, %449, %454, %459, %464, %469, %474, %479, %484 in 0 : vector<8x256xf32>, vector<8x256xf32>, vector<8x256xf32>, vector<8x256xf32>, vector<8x256xf32>, vector<8x256xf32>, vector<8x256xf32>, vector<8x256xf32>, vector<8x256xf32>, vector<8x256xf32>, vector<8x256xf32>, vector<8x256xf32>, vector<8x256xf32>, vector<8x256xf32>, vector<8x256xf32>, vector<8x256xf32> -> vector<128x256xf32>
    %493 = tpu.concatenate %490, %491, %492, %489 in 0 : vector<128x256xf32>, vector<128x256xf32>, vector<128x256xf32>, vector<8x256xf32> -> vector<392x256xf32>
    %c0_126 = arith.constant 0 : index
    %c0_127 = arith.constant 0 : index
    %494 = vector.load %arg7[%c0_126, %c0_127] : memref<1x392xf32, #tpu.memory_space<vmem>>, vector<1x392xf32>
    %cst_128 = arith.constant dense<0.000000e+00> : vector<1x256xf32>
    %495 = tpu.matmul %494, %493, %cst_128 {dimension_numbers = #tpu.dot_dimension_numbers<[1], [0], [0], [1], [0, 0, 1, 1], [], []>} : vector<1x392xf32>, vector<392x256xf32>, vector<1x256xf32> -> vector<1x256xf32>
    %496 = arith.negf %495 : vector<1x256xf32>
    %497 = math.exp %496 : vector<1x256xf32>
    %cst_129 = arith.constant 1.000000e+00 : f32
    %498 = vector.broadcast %cst_129 : f32 to vector<1x256xf32>
    %499 = arith.addf %498, %497 : vector<1x256xf32>
    %500 = arith.divf %498, %499 : vector<1x256xf32>
    %501 = vector.broadcast %500 : vector<1x256xf32> to vector<16x256xf32>
    %502 = arith.mulf %224, %501 : vector<16x256xf32>
    %c0_130 = arith.constant 0 : index
    %c0_131 = arith.constant 0 : index
    %c0_132 = arith.constant 0 : index
    %503 = vector.load %arg8[%c0_130, %c0_131, %c0_132] : memref<1x16x256xf32, #tpu.memory_space<vmem>>, vector<1x16x256xf32>
    %504 = vector.shape_cast %503 : vector<1x16x256xf32> to vector<16x256xf32>
    %505 = vector.shape_cast %502 : vector<16x256xf32> to vector<1x16x256xf32>
    tpu.vector_store %arg8[%c0_130, %c0_131, %c0_132], %505 {strides = array<i32>} : memref<1x16x256xf32, #tpu.memory_space<vmem>>, vector<1x16x256xf32>,
    return
  }
  func.func @transform_0(%arg0: i32) -> (i32, i32, i32) {
    %c0_i32 = arith.constant 0 : i32
    %c0_i32_0 = arith.constant 0 : i32
    %c0_i32_1 = arith.constant 0 : i32
    return %arg0, %c0_i32, %c0_i32_0 : i32, i32, i32
  }
  func.func @transform_1(%arg0: i32) -> (i32, i32) {
    %c0_i32 = arith.constant 0 : i32
    %c0_i32_0 = arith.constant 0 : i32
    %c0_i32_1 = arith.constant 0 : i32
    return %c0_i32, %c0_i32_0 : i32, i32
  }
  func.func @transform_2(%arg0: i32) -> (i32, i32) {
    %c0_i32 = arith.constant 0 : i32
    %c0_i32_0 = arith.constant 0 : i32
    %c0_i32_1 = arith.constant 0 : i32
    return %c0_i32, %c0_i32_0 : i32, i32
  }
  func.func @transform_3(%arg0: i32) -> (i32, i32) {
    %c0_i32 = arith.constant 0 : i32
    %c0_i32_0 = arith.constant 0 : i32
    %c0_i32_1 = arith.constant 0 : i32
    return %c0_i32, %c0_i32_0 : i32, i32
  }
  func.func @transform_4(%arg0: i32) -> (i32, i32) {
    %c0_i32 = arith.constant 0 : i32
    %c0_i32_0 = arith.constant 0 : i32
    %c0_i32_1 = arith.constant 0 : i32
    return %c0_i32, %c0_i32_0 : i32, i32
  }
  func.func @transform_5(%arg0: i32) -> (i32, i32) {
    %c0_i32 = arith.constant 0 : i32
    %c0_i32_0 = arith.constant 0 : i32
    %c0_i32_1 = arith.constant 0 : i32
    return %c0_i32, %c0_i32_0 : i32, i32
  }
  func.func @transform_6(%arg0: i32) -> (i32, i32) {
    %c0_i32 = arith.constant 0 : i32
    %c0_i32_0 = arith.constant 0 : i32
    %c0_i32_1 = arith.constant 0 : i32
    return %c0_i32, %c0_i32_0 : i32, i32
  }
  func.func @transform_7(%arg0: i32) -> (i32, i32, i32) {
    %c0_i32 = arith.constant 0 : i32
    %c0_i32_0 = arith.constant 0 : i32
    %c0_i32_1 = arith.constant 0 : i32
    return %arg0, %c0_i32, %c0_i32_0 : i32, i32, i32
  }
}

</mosaic_0001>

<llo_original>
// kernel: attention_residual_block.1
$region0: #{attention_residual_block.1}
  #allocation0 [shape = 'u32[]', space=smem, size = 0x4, offset = 0x4, fixed_abs, tag = 'smem constant byte address 0x4 - core index']
  #allocation1 [shape = 'u32[144,128]{1,0:T(1,128)}', space=vmem, size = 0x12000, scoped, tag = 'internal scratch']
  %s0 = inlined_call_operand.vmem [shape: f32[2,8,256], index: 0, kind: input, shape index: {}]
  %s1 = inlined_call_operand.vmem [shape: bf16[16,72], index: 1, kind: input, shape index: {}]
  %s2 = inlined_call_operand.vmem [shape: bf16[16,152], index: 2, kind: input, shape index: {}]
  %s3 = inlined_call_operand.vmem [shape: f32[16,2], index: 3, kind: input, shape index: {}]
  %s4 = inlined_call_operand.vmem [shape: f32[1,16], index: 4, kind: input, shape index: {}]
  %s5 = inlined_call_operand.vmem [shape: f32[16,1], index: 5, kind: input, shape index: {}]
  %s6 = inlined_call_operand.vmem [shape: f32[1,392], index: 6, kind: input, shape index: {}]
  %s7 = inlined_call_operand.vmem [shape: f32[2,16,256], index: 7, kind: output, shape index: {}]
  %s8 = sld [smem:[#allocation0]]
  $region61: #{attention_residual_block.1} parent=0
    _
  %s10 = ssub.s32 1, %s8
  %s11 = scalar_select 0, %s10, %s8
  loop: start=0, step=1, limit=4
  $region2: #{attention_residual_block.1} parent=0 // loop_pre_header
    _
  $region3: #{attention_residual_block.1} parent=0 // loop_header
    %s13 = sphi 0, %s17
    %p14 = scmp.ge.s32.totalorder %s13, 4
    %s23 = sphi 0, %s25
    %s26 = sphi 0, %s23
    %s27 = sphi 0, %s26
    %s43 = sphi 0, %s27
    %s47 = sphi 0, %s47
    %s49 = sphi 0, %s47
    %s50 = sphi 0, %s49
    %s64 = sphi 0, %s50
    %s68 = sphi 0, %s68
    %s70 = sphi 0, %s68
    %s71 = sphi 0, %s70
    %s85 = sphi 0, %s71
    %s89 = sphi 0, %s89
    %s91 = sphi 0, %s89
    %s92 = sphi 0, %s91
    %s106 = sphi 0, %s92
    %s110 = sphi 0, %s110
    %s112 = sphi 0, %s110
    %s113 = sphi 0, %s112
    %s127 = sphi 0, %s113
    %s131 = sphi 0, %s131
    %s133 = sphi 0, %s131
    %s134 = sphi 0, %s133
    %s148 = sphi 0, %s134
    %s152 = sphi 0, %s152
    %s154 = sphi 0, %s152
    %s155 = sphi 0, %s154
    %s169 = sphi 0, %s155
    %s175 = sphi 0, %s177
    %s178 = sphi 0, %s175
    %s179 = sphi 0, %s178
    %s195 = sphi 0, %s179
  $region4: #{attention_residual_block.1} parent=0 // loop_header_branch
    %16 = sbr.rel (%p14) target = $region8
  $region5: #{attention_residual_block.1} parent=0 // loop_body
    %s18 = ssub.s32 %s13, 1
    %s19 = ssub.s32 %s13, 2
    %s20 = sadd.s32 %s13, 1
    %s21 = ssub.s32 %s13, %s20
    %p22 = scmp.eq.s32.totalorder %s21, 0
    %s24 = sadd.s32 %s23, 1
    %s25 = scalar_select %p22, %s23, %s24
    %p28 = pneg %p22
    %p29 = scmp.eq.s32.totalorder %s13, 1
    %p30 = por %p28, %p29
    %p31 = scmp.ne.s32.totalorder %s23, %s26
    %p32 = scmp.eq.s32.totalorder %s13, 0
    %p33 = por %p31, %p32
    %p34 = scmp.ne.s32.totalorder %s23, %s26
    %p35 = scmp.eq.s32.totalorder %s18, 1
    %p36 = por %p34, %p35
    %p37 = scmp.ne.s32.totalorder %s26, %s27
    %p38 = scmp.eq.s32.totalorder %s18, 0
    %p39 = por %p37, %p38
    %p40 = scmp.ne.s32.totalorder %s26, %s27
    %p41 = scmp.eq.s32.totalorder %s19, 1
    %p42 = por %p40, %p41
    %p44 = scmp.ne.s32.totalorder %s27, %s43
    %p45 = scmp.eq.s32.totalorder %s19, 0
    %p46 = por %p44, %p45
    %s48 = sadd.s32 %s47, 1
    %p51 = scmp.eq.s32.totalorder %s13, 1
    %p52 = scmp.ne.s32.totalorder %s47, %s49
    %p53 = scmp.eq.s32.totalorder %s13, 0
    %p54 = por %p52, %p53
    %p55 = scmp.ne.s32.totalorder %s47, %s49
    %p56 = scmp.eq.s32.totalorder %s18, 1
    %p57 = por %p55, %p56
    %p58 = scmp.ne.s32.totalorder %s49, %s50
    %p59 = scmp.eq.s32.totalorder %s18, 0
    %p60 = por %p58, %p59
    %p61 = scmp.ne.s32.totalorder %s49, %s50
    %p62 = scmp.eq.s32.totalorder %s19, 1
    %p63 = por %p61, %p62
    %p65 = scmp.ne.s32.totalorder %s50, %s64
    %p66 = scmp.eq.s32.totalorder %s19, 0
    %p67 = por %p65, %p66
    %s69 = sadd.s32 %s68, 1
    %p72 = scmp.eq.s32.totalorder %s13, 1
    %p73 = scmp.ne.s32.totalorder %s68, %s70
    %p74 = scmp.eq.s32.totalorder %s13, 0
    %p75 = por %p73, %p74
    %p76 = scmp.ne.s32.totalorder %s68, %s70
    %p77 = scmp.eq.s32.totalorder %s18, 1
    %p78 = por %p76, %p77
    %p79 = scmp.ne.s32.totalorder %s70, %s71
    %p80 = scmp.eq.s32.totalorder %s18, 0
    %p81 = por %p79, %p80
    %p82 = scmp.ne.s32.totalorder %s70, %s71
    %p83 = scmp.eq.s32.totalorder %s19, 1
    %p84 = por %p82, %p83
    %p86 = scmp.ne.s32.totalorder %s71, %s85
    %p87 = scmp.eq.s32.totalorder %s19, 0
    %p88 = por %p86, %p87
    %s90 = sadd.s32 %s89, 1
    %p93 = scmp.eq.s32.totalorder %s13, 1
    %p94 = scmp.ne.s32.totalorder %s89, %s91
    %p95 = scmp.eq.s32.totalorder %s13, 0
    %p96 = por %p94, %p95
    %p97 = scmp.ne.s32.totalorder %s89, %s91
    %p98 = scmp.eq.s32.totalorder %s18, 1
    %p99 = por %p97, %p98
    %p100 = scmp.ne.s32.totalorder %s91, %s92
    %p101 = scmp.eq.s32.totalorder %s18, 0
    %p102 = por %p100, %p101
    %p103 = scmp.ne.s32.totalorder %s91, %s92
    %p104 = scmp.eq.s32.totalorder %s19, 1
    %p105 = por %p103, %p104
    %p107 = scmp.ne.s32.totalorder %s92, %s106
    %p108 = scmp.eq.s32.totalorder %s19, 0
    %p109 = por %p107, %p108
    %s111 = sadd.s32 %s110, 1
    %p114 = scmp.eq.s32.totalorder %s13, 1
    %p115 = scmp.ne.s32.totalorder %s110, %s112
    %p116 = scmp.eq.s32.totalorder %s13, 0
    %p117 = por %p115, %p116
    %p118 = scmp.ne.s32.totalorder %s110, %s112
    %p119 = scmp.eq.s32.totalorder %s18, 1
    %p120 = por %p118, %p119
    %p121 = scmp.ne.s32.totalorder %s112, %s113
    %p122 = scmp.eq.s32.totalorder %s18, 0
    %p123 = por %p121, %p122
    %p124 = scmp.ne.s32.totalorder %s112, %s113
    %p125 = scmp.eq.s32.totalorder %s19, 1
    %p126 = por %p124, %p125
    %p128 = scmp.ne.s32.totalorder %s113, %s127
    %p129 = scmp.eq.s32.totalorder %s19, 0
    %p130 = por %p128, %p129
    %s132 = sadd.s32 %s131, 1
    %p135 = scmp.eq.s32.totalorder %s13, 1
    %p136 = scmp.ne.s32.totalorder %s131, %s133
    %p137 = scmp.eq.s32.totalorder %s13, 0
    %p138 = por %p136, %p137
    %p139 = scmp.ne.s32.totalorder %s131, %s133
    %p140 = scmp.eq.s32.totalorder %s18, 1
    %p141 = por %p139, %p140
    %p142 = scmp.ne.s32.totalorder %s133, %s134
    %p143 = scmp.eq.s32.totalorder %s18, 0
    %p144 = por %p142, %p143
    %p145 = scmp.ne.s32.totalorder %s133, %s134
    %p146 = scmp.eq.s32.totalorder %s19, 1
    %p147 = por %p145, %p146
    %p149 = scmp.ne.s32.totalorder %s134, %s148
    %p150 = scmp.eq.s32.totalorder %s19, 0
    %p151 = por %p149, %p150
    %s153 = sadd.s32 %s152, 1
    %p156 = scmp.eq.s32.totalorder %s13, 1
    %p157 = scmp.ne.s32.totalorder %s152, %s154
    %p158 = scmp.eq.s32.totalorder %s13, 0
    %p159 = por %p157, %p158
    %p160 = scmp.ne.s32.totalorder %s152, %s154
    %p161 = scmp.eq.s32.totalorder %s18, 1
    %p162 = por %p160, %p161
    %p163 = scmp.ne.s32.totalorder %s154, %s155
    %p164 = scmp.eq.s32.totalorder %s18, 0
    %p165 = por %p163, %p164
    %p166 = scmp.ne.s32.totalorder %s154, %s155
    %p167 = scmp.eq.s32.totalorder %s19, 1
    %p168 = por %p166, %p167
    %p170 = scmp.ne.s32.totalorder %s155, %s169
    %p171 = scmp.eq.s32.totalorder %s19, 0
    %p172 = por %p170, %p171
    %s173 = ssub.s32 %s13, %s20
    %p174 = scmp.eq.s32.totalorder %s173, 0
    %s176 = sadd.s32 %s175, 1
    %s177 = scalar_select %p174, %s175, %s176
    %p180 = pneg %p174
    %p181 = scmp.eq.s32.totalorder %s13, 1
    %p182 = por %p180, %p181
    %p183 = scmp.ne.s32.totalorder %s175, %s178
    %p184 = scmp.eq.s32.totalorder %s13, 0
    %p185 = por %p183, %p184
    %p186 = scmp.ne.s32.totalorder %s175, %s178
    %p187 = scmp.eq.s32.totalorder %s18, 1
    %p188 = por %p186, %p187
    %p189 = scmp.ne.s32.totalorder %s178, %s179
    %p190 = scmp.eq.s32.totalorder %s18, 0
    %p191 = por %p189, %p190
    %p192 = scmp.ne.s32.totalorder %s178, %s179
    %p193 = scmp.eq.s32.totalorder %s19, 1
    %p194 = por %p192, %p193
    %p196 = scmp.ne.s32.totalorder %s179, %s195
    %p197 = scmp.eq.s32.totalorder %s19, 0
    %p198 = por %p196, %p197
    %p199 = scmp.le.s32.totalorder 1, %s13
    %p200 = scmp.lt.s32.totalorder %s13, 3
    %p201 = pnand %p199, %p200
    %p202 = pneg %p201
    // Predicated region
    $region9: #{attention_residual_block.1} parent=5 // pred_check
      _
    $region10: #{attention_residual_block.1} parent=5 // pred_check_branch
      %204 = sbr.rel (%p201) target = $region12
    $region11: #{attention_residual_block.1} parent=5 // pred_region
      %s205 = ssub.s32 %s13, 1
      // Predicated region
      $region13: #{attention_residual_block.1} parent=11 // pred_check
        %p206 = pneg %p60
      $region14: #{attention_residual_block.1} parent=11 // pred_check_branch
        %208 = sbr.rel (%p206) target = $region16
      $region15: #{attention_residual_block.1} parent=11 // pred_region
        _
      $region16: #{attention_residual_block.1} parent=11 // pred_fallthru
        _
      // Predicated region
      $region17: #{attention_residual_block.1} parent=11 // pred_check
        %p209 = pneg %p81
      $region18: #{attention_residual_block.1} parent=11 // pred_check_branch
        %211 = sbr.rel (%p209) target = $region20
      $region19: #{attention_residual_block.1} parent=11 // pred_region
        _
      $region20: #{attention_residual_block.1} parent=11 // pred_fallthru
        _
      // Predicated region
      $region21: #{attention_residual_block.1} parent=11 // pred_check
        %p212 = pneg %p102
      $region22: #{attention_residual_block.1} parent=11 // pred_check_branch
        %214 = sbr.rel (%p212) target = $region24
      $region23: #{attention_residual_block.1} parent=11 // pred_region
        _
      $region24: #{attention_residual_block.1} parent=11 // pred_fallthru
        _
      // Predicated region
      $region25: #{attention_residual_block.1} parent=11 // pred_check
        %p215 = pneg %p123
      $region26: #{attention_residual_block.1} parent=11 // pred_check_branch
        %217 = sbr.rel (%p215) target = $region28
      $region27: #{attention_residual_block.1} parent=11 // pred_region
        _
      $region28: #{attention_residual_block.1} parent=11 // pred_fallthru
        _
      // Predicated region
      $region29: #{attention_residual_block.1} parent=11 // pred_check
        %p218 = pneg %p144
      $region30: #{attention_residual_block.1} parent=11 // pred_check_branch
        %220 = sbr.rel (%p218) target = $region32
      $region31: #{attention_residual_block.1} parent=11 // pred_region
        _
      $region32: #{attention_residual_block.1} parent=11 // pred_fallthru
        _
      // Predicated region
      $region33: #{attention_residual_block.1} parent=11 // pred_check
        %p221 = pneg %p165
      $region34: #{attention_residual_block.1} parent=11 // pred_check_branch
        %223 = sbr.rel (%p221) target = $region36
      $region35: #{attention_residual_block.1} parent=11 // pred_region
        _
      $region36: #{attention_residual_block.1} parent=11 // pred_fallthru
        _
    $region12: #{attention_residual_block.1} parent=5 // pred_fallthru
      _
    %p224 = scmp.lt.s32.totalorder %s13, 2
    // Predicated region
    $region37: #{attention_residual_block.1} parent=5 // pred_check
      %p225 = pneg %p224
    $region38: #{attention_residual_block.1} parent=5 // pred_check_branch
      %227 = sbr.rel (%p225) target = $region40
    $region39: #{attention_residual_block.1} parent=5 // pred_region
      // Predicated region
      $region41: #{attention_residual_block.1} parent=39 // pred_check
        %p228 = pneg %p33
      $region42: #{attention_residual_block.1} parent=39 // pred_check_branch
        %230 = sbr.rel (%p228) target = $region44
      $region43: #{attention_residual_block.1} parent=39 // pred_region
        %p231 = scmp.lt.s32.totalorder %s13, 1
        %s232 = scalar_select %p231, %s13, 1
        %s233 = smul.addr %s232, 2
        %s234 = smul.addr %s233, 8
        %s235 = scalar_lea.vmem %s0, %s234
      $region44: #{attention_residual_block.1} parent=39 // pred_fallthru
        _
    $region40: #{attention_residual_block.1} parent=5 // pred_fallthru
      _
    %p236 = scmp.le.s32.totalorder 1, %s13
    %p237 = scmp.lt.s32.totalorder %s13, 3
    %p238 = pnand %p236, %p237
    %p239 = pneg %p238
    // Predicated region
    $region45: #{attention_residual_block.1} parent=5 // pred_check
      _
    $region46: #{attention_residual_block.1} parent=5 // pred_check_branch
      %241 = sbr.rel (%p238) target = $region48
    $region47: #{attention_residual_block.1} parent=5 // pred_region
      %s242 = ssub.s32 %s13, 1
      %p243 = scmp.lt.s32.totalorder %s18, 1
      %s244 = scalar_select %p243, %s18, 1
      %s245 = smul.addr %s244, 2
      %s246 = smul.addr %s245, 8
      %s247 = scalar_lea.vmem %s0, %s246
      %p248 = pneg %p39
      %p249 = pneg %p36
      %p250 = pneg %p60
      %p251 = pneg %p57
      %p252 = pneg %p81
      %p253 = pneg %p78
      %p254 = pneg %p102
      %p255 = pneg %p99
      %p256 = pneg %p123
      %p257 = pneg %p120
      %p258 = pneg %p144
      %p259 = pneg %p141
      %p260 = pneg %p165
      %p261 = pneg %p162
      %p262 = pneg %p191
      %p263 = pneg %p188
      %p264 = scmp.lt.s32.totalorder %s18, 1
      %s265 = scalar_select %p264, %s18, 1
      %s266 = smul.addr %s265, 4
      %s267 = smul.addr %s266, 8
      %s268 = scalar_lea.vmem %s7, %s267
      %p269 = scmp.lt.s32.totalorder %s18, 1
      %s270 = scalar_select %p269, %s18, 1
      %s271 = smul.addr %s270, 2
      %s272 = smul.addr %s271, 8
      %s273 = scalar_lea.vmem %s0, %s272
      %p274 = scmp.lt.s32.totalorder %s18, 1
      %s275 = scalar_select %p274, %s18, 1
      %s276 = smul.addr %s275, 4
      %s277 = smul.addr %s276, 8
      %s278 = scalar_lea.vmem %s7, %s277
      %v280 = vlaneseq
      %v281 = vand.u32 %v280, 127
      %v282 = vadd.s32 %v281, 128
      %vm283 = vcmp.lt.s32.totalorder %v281, 0
      %v284 = vsub.s32 0, %v281
      %v285 = vsel %vm283, %v284, %v281
      %v286 = vshrl.u32 %v285, 4
      %v287 = vand.u32 %v285, 15
      %v288 = vsub.s32 0, %v287
      %v289 = vsel %vm283, %v288, %v287
      %vm290 = vcmp.lt.s32.totalorder %v282, 0
      %v291 = vsub.s32 0, %v282
      %v292 = vsel %vm290, %v291, %v282
      %v293 = vshrl.u32 %v292, 4
      %v294 = vand.u32 %v292, 15
      %v295 = vsub.s32 0, %v294
      %v296 = vsel %vm290, %v295, %v294
      %vm297 = vcmp.ne.s32.totalorder %v289, 0
      %vm298 = vcmp.ne.s32.totalorder %v296, 0
      %vm299 = vcmp.lt.s32.totalorder %v289, 0
      %vm300 = vcmp.lt.s32.totalorder %v296, 0
      %vm301 = vmand %vm299, %vm297
      %vm302 = vmand %vm300, %vm298
      %v303 = vadd.s32 %v289, 16
      %v304 = vadd.s32 %v296, 16
      %v305 = vsel %vm301, %v303, %v289
      %v306 = vsel %vm302, %v304, %v296
      %v307 = vadd.s32 %v305, 4294967293
      %v308 = vadd.s32 %v306, 4294967293
      %vm309 = vcmp.ge.s32.totalorder %v307, 0
      %vm310 = vcmp.ge.s32.totalorder %v308, 0
      %vm311 = vcmp.lt.s32.totalorder %v307, 16
      %vm312 = vcmp.lt.s32.totalorder %v308, 16
      %vm313 = vmand %vm309, %vm311
      %vm314 = vmand %vm310, %vm312
      %v315 = vadd.s32 %v305, 4294967294
      %v316 = vadd.s32 %v306, 4294967294
      %vm317 = vcmp.ge.s32.totalorder %v315, 0
      %vm318 = vcmp.ge.s32.totalorder %v316, 0
      %vm319 = vcmp.lt.s32.totalorder %v315, 16
      %vm320 = vcmp.lt.s32.totalorder %v316, 16
      %vm321 = vmand %vm317, %vm319
      %vm322 = vmand %vm318, %vm320
      %v323 = vadd.s32 %v305, 4294967295
      %v324 = vadd.s32 %v306, 4294967295
      %vm325 = vcmp.ge.s32.totalorder %v323, 0
      %vm326 = vcmp.ge.s32.totalorder %v324, 0
      %vm327 = vcmp.lt.s32.totalorder %v323, 16
      %vm328 = vcmp.lt.s32.totalorder %v324, 16
      %vm329 = vmand %vm325, %vm327
      %vm330 = vmand %vm326, %vm328
      %vm331 = vcmp.ge.s32.totalorder %v305, 0
      %vm332 = vcmp.ge.s32.totalorder %v306, 0
      %vm333 = vcmp.lt.s32.totalorder %v305, 16
      %vm334 = vcmp.lt.s32.totalorder %v306, 16
      %vm335 = vmand %vm331, %vm333
      %vm336 = vmand %vm332, %vm334
      %v337 = vadd.s32 %v305, 1
      %v338 = vadd.s32 %v306, 1
      %vm339 = vcmp.ge.s32.totalorder %v337, 0
      %vm340 = vcmp.ge.s32.totalorder %v338, 0
      %vm341 = vcmp.lt.s32.totalorder %v337, 16
      %vm342 = vcmp.lt.s32.totalorder %v338, 16
      %vm343 = vmand %vm339, %vm341
      %vm344 = vmand %vm340, %vm342
      %v345 = vadd.s32 %v305, 2
      %v346 = vadd.s32 %v306, 2
      %vm347 = vcmp.ge.s32.totalorder %v345, 0
      %vm348 = vcmp.ge.s32.totalorder %v346, 0
      %vm349 = vcmp.lt.s32.totalorder %v345, 16
      %vm350 = vcmp.lt.s32.totalorder %v346, 16
      %vm351 = vmand %vm347, %vm349
      %vm352 = vmand %vm348, %vm350
      %v353 = vadd.s32 %v305, 3
      %v354 = vadd.s32 %v306, 3
      %vm355 = vcmp.ge.s32.totalorder %v353, 0
      %vm356 = vcmp.ge.s32.totalorder %v354, 0
      %vm357 = vcmp.lt.s32.totalorder %v353, 16
      %vm358 = vcmp.lt.s32.totalorder %v354, 16
      %vm359 = vmand %vm355, %vm357
      %vm360 = vmand %vm356, %vm358
      %v361 = vld [vmem:[%s273] sm:$0xff]
      %v362 = vld [vmem:[%s273 + $0x8] sm:$0xff]
      %v363 = vld [vmem:[%s1] sm:$0xf]
      %v364 = vld [vmem:[%s1 + $0x4] sm:$0xf]
      %v365 = vsel %vm329, 1, 0
      %v366 = vsel %vm330, 1, 0
      %vm367 = vcmp.eq.s32.totalorder %v365, 1
      %vm368 = vcmp.eq.s32.totalorder %v366, 1
      %372 = vrot.lane.b32.xlu0 0.0, 17
      %v373 = vpop.permute.xlu0 %372
      %374 = vrot.lane.b32.xlu0 %v361, 17
      %v375 = vpop.permute.xlu0 %374
      %376 = vrot.lane.b32.xlu0 %v362, 17
      %v377 = vpop.permute.xlu0 %376
      %vm378 = vcmask 138240
      %v379 = vsel %vm378, %v373, %v375
      %v380 = vsel %vm378, %v375, %v377
      %v383 = vsel %vm367, %v379, 0.0
      %v384 = vsel %vm368, %v380, 0.0
      %v385 = vsel %vm335, 1, 0
      %v386 = vsel %vm336, 1, 0
      %vm387 = vcmp.eq.s32.totalorder %v385, 1
      %vm388 = vcmp.eq.s32.totalorder %v386, 1
      %389 = vrot.lane.b32.xlu0 0.0, 16
      %v390 = vpop.permute.xlu0 %389
      %391 = vrot.lane.b32.xlu0 %v361, 16
      %v392 = vpop.permute.xlu0 %391
      %393 = vrot.lane.b32.xlu0 %v362, 16
      %v394 = vpop.permute.xlu0 %393
      %vm395 = vcmask 130048
      %v396 = vsel %vm395, %v390, %v392
      %v397 = vsel %vm395, %v392, %v394
      %v400 = vsel %vm387, %v396, 0.0
      %v401 = vsel %vm388, %v397, 0.0
      %v402 = vsel %vm343, 1, 0
      %v403 = vsel %vm344, 1, 0
      %vm404 = vcmp.eq.s32.totalorder %v402, 1
      %vm405 = vcmp.eq.s32.totalorder %v403, 1
      %406 = vrot.lane.b32.xlu0 0.0, 15
      %v407 = vpop.permute.xlu0 %406
      %408 = vrot.lane.b32.xlu0 %v361, 15
      %v409 = vpop.permute.xlu0 %408
      %410 = vrot.lane.b32.xlu0 %v362, 15
      %v411 = vpop.permute.xlu0 %410
      %vm412 = vcmask 121856
      %v413 = vsel %vm412, %v407, %v409
      %v414 = vsel %vm412, %v409, %v411
      %v417 = vsel %vm404, %v413, 0.0
      %v418 = vsel %vm405, %v414, 0.0
      %419 = vrot.lane.b32.xlu0 0.0, 1
      %v420 = vpop.permute.xlu0 %419
      %421 = vrot.lane.b32.xlu0 %v361, 1
      %v422 = vpop.permute.xlu0 %421
      %423 = vrot.lane.b32.xlu0 %v362, 1
      %v424 = vpop.permute.xlu0 %423
      %vm425 = vcmask 7168
      %v426 = vsel %vm425, %v420, %v422
      %v427 = vsel %vm425, %v422, %v424
      %v430 = vsel %vm367, %v426, 0.0
      %v431 = vsel %vm368, %v427, 0.0
      %v432 = vsel %vm387, %v361, 0.0
      %v433 = vsel %vm388, %v362, 0.0
      %434 = vrot.lane.b32.xlu0 %v361, 127
      %v435 = vpop.permute.xlu0 %434
      %436 = vrot.lane.b32.xlu0 %v362, 127
      %v437 = vpop.permute.xlu0 %436
      %438 = vrot.lane.b32.xlu0 0.0, 127
      %v439 = vpop.permute.xlu0 %438
      %vm440 = vcmask 1039360
      %v441 = vsel %vm440, %v435, %v437
      %v442 = vsel %vm440, %v437, %v439
      %v445 = vsel %vm404, %v441, 0.0
      %v446 = vsel %vm405, %v442, 0.0
      %447 = vrot.lane.b32.xlu0 %v361, 113
      %v448 = vpop.permute.xlu0 %447
      %449 = vrot.lane.b32.xlu0 %v362, 113
      %v450 = vpop.permute.xlu0 %449
      %451 = vrot.lane.b32.xlu0 0.0, 113
      %v452 = vpop.permute.xlu0 %451
      %vm453 = vcmask 924672
      %v454 = vsel %vm453, %v448, %v450
      %v455 = vsel %vm453, %v450, %v452
      %v458 = vsel %vm367, %v454, 0.0
      %v459 = vsel %vm368, %v455, 0.0
      %460 = vrot.lane.b32.xlu0 %v361, 112
      %v461 = vpop.permute.xlu0 %460
      %462 = vrot.lane.b32.xlu0 %v362, 112
      %v463 = vpop.permute.xlu0 %462
      %464 = vrot.lane.b32.xlu0 0.0, 112
      %v465 = vpop.permute.xlu0 %464
      %vm466 = vcmask 916480
      %v467 = vsel %vm466, %v461, %v463
      %v468 = vsel %vm466, %v463, %v465
      %v471 = vsel %vm387, %v467, 0.0
      %v472 = vsel %vm388, %v468, 0.0
      %473 = vrot.lane.b32.xlu0 %v361, 111
      %v474 = vpop.permute.xlu0 %473
      %475 = vrot.lane.b32.xlu0 %v362, 111
      %v476 = vpop.permute.xlu0 %475
      %477 = vrot.lane.b32.xlu0 0.0, 111
      %v478 = vpop.permute.xlu0 %477
      %vm479 = vcmask 908288
      %v480 = vsel %vm479, %v474, %v476
      %v481 = vsel %vm479, %v476, %v478
      %v484 = vsel %vm404, %v480, 0.0
      %v485 = vsel %vm405, %v481, 0.0
      %v486 = vpack.c.bf16 %v400, %v383
      %v487 = vpack.c.bf16 %v401, %v384
      %v488 = vpack.c.bf16 %v430, %v417
      %v489 = vpack.c.bf16 %v431, %v418
      %v490 = vpack.c.bf16 %v445, %v432
      %v491 = vpack.c.bf16 %v446, %v433
      %v492 = vpack.c.bf16 %v471, %v458
      %v493 = vpack.c.bf16 %v472, %v459
      %v494 = vpack.c.bf16 %v484, %v484
      %v495 = vpack.c.bf16 %v485, %v485
      %v496 = vld [vmem:[%s3] sm:$0xff]
      %v497 = vld [vmem:[%s3 + $0x8] sm:$0xff]
      %499 = vset.pattern.permute.xlu0 0
      %500 = vperm.xlu0 %499, %v496
      %v501 = vpop.permute.xlu0 %500
      %504 = vset.pattern.permute.xlu0 0
      %505 = vperm.xlu0 %504, %v497
      %v506 = vpop.permute.xlu0 %505
      %v510 = vunpack.c.l.b16 %v363
      %v511 = vunpack.c.l.b16 %v364
      %v512 = vpack.c.b16 %v511, %v510
      %vm513 = vcmask 588800
      %v515 = vsel %vm513, %v512, 0
      %vm517 = vcmask 1043456
      %v519 = vsel %vm517, %v494, 0
      %v522 = vsel %vm517, %v495, 0
      %524 = vmatprep.subr.bf16.mxu0 %v487
      %525 = vmatpush1.bf16.msra.mxu0 %v486
      %526 = vmatprep.subr.bf16.mxu0 %v489
      %527 = vmatpush1.bf16.msra.mxu0 %v488
      %528 = vmatprep.subr.bf16.mxu0 %v491
      %529 = vmatpush1.bf16.msra.mxu0 %v490
      %530 = vmatprep.subr.bf16.mxu0 %v493
      %531 = vmatpush1.bf16.msra.mxu0 %v492
      %532 = vmatprep.subr.bf16.mxu0 %v522
      %533 = vmatpush1.bf16.msra.mxu0 %v519
      %534 = vmatprep.subr.bf16.mxu0 0
      %535 = vmatpush1.bf16.msra.mxu0 0
      %536 = vmatprep.subr.bf16.mxu0 0
      %537 = vmatpush1.bf16.msra.mxu0 0
      %538 = vmatprep.subr.bf16.mxu0 0
      %539 = vmatpush1.bf16.msra.mxu0 0
      %540 = vmatprep.subr.bf16.mxu0 0
      %541 = vmatpush1.bf16.msra.mxu0 0
      %542 = vmatprep.subr.bf16.mxu0 0
      %543 = vmatpush1.bf16.msra.mxu0 0
      %544 = vmatprep.subr.bf16.mxu0 0
      %545 = vmatpush1.bf16.msra.mxu0 0
      %546 = vmatprep.subr.bf16.mxu0 0
      %547 = vmatpush1.bf16.msra.mxu0 0
      %548 = vmatprep.subr.bf16.mxu0 0
      %549 = vmatpush1.bf16.msra.mxu0 0
      %550 = vmatprep.subr.bf16.mxu0 0
      %551 = vmatpush1.bf16.msra.mxu0 0
      %552 = vmatprep.subr.bf16.mxu0 0
      %553 = vmatpush1.bf16.msra.mxu0 0
      %554 = vmatprep.subr.bf16.mxu0 0
      %555 = vmatpush1.bf16.msra.mxu0 0
      %556 = vmatprep.mubr.bf16.mxu0 0
      %557 = vmatmul.mubr.bf16.gmra.mrb[0].mxu0 %v515
      %v558 = vpop.f32.mrb[0].mxu0
      %v559 = vadd.f32 %v501, %v558
      %v560 = vpop.f32.mrb[0].mxu0
      %v561 = vadd.f32 %v501, %v560
      %v562 = vpop.f32.mrb[0].mxu0
      %v563 = vadd.f32 %v506, %v562
      %v564 = vpop.f32.mrb[0].mxu0
      %v565 = vadd.f32 %v506, %v564
      %566 = vdwg.mxu0
      %v567 = vmax.f32 %v559, 0.0
      %v568 = vmax.f32 %v561, 0.0
      %v569 = vmax.f32 %v563, 0.0
      %v570 = vmax.f32 %v565, 0.0
      %575 = vrot.lane.b32.xlu0 %v567, 17
      %v576 = vpop.permute.xlu0 %575
      %577 = vrot.lane.b32.xlu0 %v568, 17
      %v578 = vpop.permute.xlu0 %577
      %579 = vrot.lane.b32.xlu0 %v569, 17
      %v580 = vpop.permute.xlu0 %579
      %581 = vrot.lane.b32.xlu0 %v570, 17
      %v582 = vpop.permute.xlu0 %581
      %v583 = vsel %vm378, %v373, %v576
      %v584 = vsel %vm378, %v576, %v578
      %v585 = vsel %vm378, %v373, %v580
      %v586 = vsel %vm378, %v580, %v582
      %v591 = vsel %vm367, %v583, 0.0
      %v592 = vsel %vm368, %v584, 0.0
      %v593 = vsel %vm367, %v585, 0.0
      %v594 = vsel %vm368, %v586, 0.0
      %595 = vrot.lane.b32.xlu0 %v567, 16
      %v596 = vpop.permute.xlu0 %595
      %597 = vrot.lane.b32.xlu0 %v568, 16
      %v598 = vpop.permute.xlu0 %597
      %599 = vrot.lane.b32.xlu0 %v569, 16
      %v600 = vpop.permute.xlu0 %599
      %601 = vrot.lane.b32.xlu0 %v570, 16
      %v602 = vpop.permute.xlu0 %601
      %v603 = vsel %vm395, %v390, %v596
      %v604 = vsel %vm395, %v596, %v598
      %v605 = vsel %vm395, %v390, %v600
      %v606 = vsel %vm395, %v600, %v602
      %v611 = vsel %vm387, %v603, 0.0
      %v612 = vsel %vm388, %v604, 0.0
      %v613 = vsel %vm387, %v605, 0.0
      %v614 = vsel %vm388, %v606, 0.0
      %615 = vrot.lane.b32.xlu0 %v567, 15
      %v616 = vpop.permute.xlu0 %615
      %617 = vrot.lane.b32.xlu0 %v568, 15
      %v618 = vpop.permute.xlu0 %617
      %619 = vrot.lane.b32.xlu0 %v569, 15
      %v620 = vpop.permute.xlu0 %619
      %621 = vrot.lane.b32.xlu0 %v570, 15
      %v622 = vpop.permute.xlu0 %621
      %v623 = vsel %vm412, %v407, %v616
      %v624 = vsel %vm412, %v616, %v618
      %v625 = vsel %vm412, %v407, %v620
      %v626 = vsel %vm412, %v620, %v622
      %v631 = vsel %vm404, %v623, 0.0
      %v632 = vsel %vm405, %v624, 0.0
      %v633 = vsel %vm404, %v625, 0.0
      %v634 = vsel %vm405, %v626, 0.0
      %635 = vrot.lane.b32.xlu0 %v567, 1
      %v636 = vpop.permute.xlu0 %635
      %637 = vrot.lane.b32.xlu0 %v568, 1
      %v638 = vpop.permute.xlu0 %637
      %639 = vrot.lane.b32.xlu0 %v569, 1
      %v640 = vpop.permute.xlu0 %639
      %641 = vrot.lane.b32.xlu0 %v570, 1
      %v642 = vpop.permute.xlu0 %641
      %v643 = vsel %vm425, %v420, %v636
      %v644 = vsel %vm425, %v636, %v638
      %v645 = vsel %vm425, %v420, %v640
      %v646 = vsel %vm425, %v640, %v642
      %v651 = vsel %vm367, %v643, 0.0
      %v652 = vsel %vm368, %v644, 0.0
      %v653 = vsel %vm367, %v645, 0.0
      %v654 = vsel %vm368, %v646, 0.0
      %v655 = vsel %vm387, %v567, 0.0
      %v656 = vsel %vm388, %v568, 0.0
      %v657 = vsel %vm387, %v569, 0.0
      %v658 = vsel %vm388, %v570, 0.0
      %659 = vrot.lane.b32.xlu0 %v567, 127
      %v660 = vpop.permute.xlu0 %659
      %661 = vrot.lane.b32.xlu0 %v568, 127
      %v662 = vpop.permute.xlu0 %661
      %663 = vrot.lane.b32.xlu0 %v569, 127
      %v664 = vpop.permute.xlu0 %663
      %665 = vrot.lane.b32.xlu0 %v570, 127
      %v666 = vpop.permute.xlu0 %665
      %v667 = vsel %vm440, %v660, %v662
      %v668 = vsel %vm440, %v662, %v439
      %v669 = vsel %vm440, %v664, %v666
      %v670 = vsel %vm440, %v666, %v439
      %v675 = vsel %vm404, %v667, 0.0
      %v676 = vsel %vm405, %v668, 0.0
      %v677 = vsel %vm404, %v669, 0.0
      %v678 = vsel %vm405, %v670, 0.0
      %679 = vrot.lane.b32.xlu0 %v567, 113
      %v680 = vpop.permute.xlu0 %679
      %681 = vrot.lane.b32.xlu0 %v568, 113
      %v682 = vpop.permute.xlu0 %681
      %683 = vrot.lane.b32.xlu0 %v569, 113
      %v684 = vpop.permute.xlu0 %683
      %685 = vrot.lane.b32.xlu0 %v570, 113
      %v686 = vpop.permute.xlu0 %685
      %v687 = vsel %vm453, %v680, %v682
      %v688 = vsel %vm453, %v682, %v452
      %v689 = vsel %vm453, %v684, %v686
      %v690 = vsel %vm453, %v686, %v452
      %v695 = vsel %vm367, %v687, 0.0
      %v696 = vsel %vm368, %v688, 0.0
      %v697 = vsel %vm367, %v689, 0.0
      %v698 = vsel %vm368, %v690, 0.0
      %699 = vrot.lane.b32.xlu0 %v567, 112
      %v700 = vpop.permute.xlu0 %699
      %701 = vrot.lane.b32.xlu0 %v568, 112
      %v702 = vpop.permute.xlu0 %701
      %703 = vrot.lane.b32.xlu0 %v569, 112
      %v704 = vpop.permute.xlu0 %703
      %705 = vrot.lane.b32.xlu0 %v570, 112
      %v706 = vpop.permute.xlu0 %705
      %v707 = vsel %vm466, %v700, %v702
      %v708 = vsel %vm466, %v702, %v465
      %v709 = vsel %vm466, %v704, %v706
      %v710 = vsel %vm466, %v706, %v465
      %v715 = vsel %vm387, %v707, 0.0
      %v716 = vsel %vm388, %v708, 0.0
      %v717 = vsel %vm387, %v709, 0.0
      %v718 = vsel %vm388, %v710, 0.0
      %719 = vrot.lane.b32.xlu0 %v567, 111
      %v720 = vpop.permute.xlu0 %719
      %721 = vrot.lane.b32.xlu0 %v568, 111
      %v722 = vpop.permute.xlu0 %721
      %723 = vrot.lane.b32.xlu0 %v569, 111
      %v724 = vpop.permute.xlu0 %723
      %725 = vrot.lane.b32.xlu0 %v570, 111
      %v726 = vpop.permute.xlu0 %725
      %v727 = vsel %vm479, %v720, %v722
      %v728 = vsel %vm479, %v722, %v478
      %v729 = vsel %vm479, %v724, %v726
      %v730 = vsel %vm479, %v726, %v478
      %v735 = vsel %vm404, %v727, 0.0
      %v736 = vsel %vm405, %v728, 0.0
      %v737 = vsel %vm404, %v729, 0.0
      %v738 = vsel %vm405, %v730, 0.0
      %v739 = vpack.c.bf16 %v593, %v591
      %v740 = vpack.c.bf16 %v594, %v592
      %v741 = vpack.c.bf16 %v613, %v611
      %v742 = vpack.c.bf16 %v614, %v612
      %v743 = vpack.c.bf16 %v633, %v631
      %v744 = vpack.c.bf16 %v634, %v632
      %v745 = vpack.c.bf16 %v653, %v651
      %v746 = vpack.c.bf16 %v654, %v652
      %v747 = vpack.c.bf16 %v657, %v655
      %v748 = vpack.c.bf16 %v658, %v656
      %v749 = vpack.c.bf16 %v677, %v675
      %v750 = vpack.c.bf16 %v678, %v676
      %v751 = vpack.c.bf16 %v697, %v695
      %v752 = vpack.c.bf16 %v698, %v696
      %v753 = vpack.c.bf16 %v717, %v715
      %v754 = vpack.c.bf16 %v718, %v716
      %v755 = vpack.c.bf16 %v737, %v735
      %v756 = vpack.c.bf16 %v738, %v736
      %v757 = vpack.c.bf16 %v361, %v361
      %v758 = vpack.c.bf16 %v362, %v362
      %v759 = vld [vmem:[%s2] sm:$0xff]
      %v760 = vld [vmem:[%s2 + $0x8] sm:$0xff]
      %761 = vset.pattern.permute.xlu0 1
      %762 = vperm.xlu0 %761, %v496
      %v763 = vpop.permute.xlu0 %762
      %765 = vset.pattern.permute.xlu0 1
      %766 = vperm.xlu0 %765, %v497
      %v767 = vpop.permute.xlu0 %766
      %v771 = vunpack.c.l.b16 %v759
      %v772 = vunpack.c.h.b16 %v759
      %v773 = vunpack.c.l.b16 %v760
      %v774 = vunpack.c.h.b16 %v760
      %v775 = vpack.c.b16 %v773, %v771
      %v776 = vpack.c.b16 %v774, %v772
      %vm778 = vcmask 195584
      %v780 = vsel %vm778, %v776, 0
      %v783 = vsel %vm517, %v757, 0
      %v786 = vsel %vm517, %v758, 0
      %788 = vmatprep.subr.bf16.mxu0 %v740
      %789 = vmatpush1.bf16.msra.mxu0 %v739
      %790 = vmatprep.subr.bf16.mxu0 %v742
      %791 = vmatpush1.bf16.msra.mxu0 %v741
      %792 = vmatprep.subr.bf16.mxu0 %v744
      %793 = vmatpush1.bf16.msra.mxu0 %v743
      %794 = vmatprep.subr.bf16.mxu0 %v746
      %795 = vmatpush1.bf16.msra.mxu0 %v745
      %796 = vmatprep.subr.bf16.mxu0 %v748
      %797 = vmatpush1.bf16.msra.mxu0 %v747
      %798 = vmatprep.subr.bf16.mxu0 %v750
      %799 = vmatpush1.bf16.msra.mxu0 %v749
      %800 = vmatprep.subr.bf16.mxu0 %v752
      %801 = vmatpush1.bf16.msra.mxu0 %v751
      %802 = vmatprep.subr.bf16.mxu0 %v754
      %803 = vmatpush1.bf16.msra.mxu0 %v753
      %804 = vmatprep.subr.bf16.mxu0 %v756
      %805 = vmatpush1.bf16.msra.mxu0 %v755
      %806 = vmatprep.subr.bf16.mxu0 %v786
      %807 = vmatpush1.bf16.msra.mxu0 %v783
      %808 = vmatprep.subr.bf16.mxu0 0
      %809 = vmatpush1.bf16.msra.mxu0 0
      %810 = vmatprep.subr.bf16.mxu0 0
      %811 = vmatpush1.bf16.msra.mxu0 0
      %812 = vmatprep.subr.bf16.mxu0 0
      %813 = vmatpush1.bf16.msra.mxu0 0
      %814 = vmatprep.subr.bf16.mxu0 0
      %815 = vmatpush1.bf16.msra.mxu0 0
      %816 = vmatprep.subr.bf16.mxu0 0
      %817 = vmatpush1.bf16.msra.mxu0 0
      %818 = vmatprep.subr.bf16.mxu0 0
      %819 = vmatpush1.bf16.msra.mxu0 0
      %820 = vmatprep.mubr.bf16.mxu0 %v780
      %821 = vmatmul.mubr.bf16.gmra.mrb[0].mxu0 %v775
      %v822 = vpop.f32.mrb[0].mxu0
      %v823 = vadd.f32 %v763, %v822
      %v824 = vpop.f32.mrb[0].mxu0
      %v825 = vadd.f32 %v763, %v824
      %v826 = vpop.f32.mrb[0].mxu0
      %v827 = vadd.f32 %v767, %v826
      %v828 = vpop.f32.mrb[0].mxu0
      %v829 = vadd.f32 %v767, %v828
      %830 = vdwg.mxu0
      %v831 = vmax.f32 %v823, 0.0
      %v832 = vmax.f32 %v825, 0.0
      %v833 = vmax.f32 %v827, 0.0
      %v834 = vmax.f32 %v829, 0.0
      %v835 = vadd.f32 %v831, %v832
      %836 = vadd.xlane.f32.xlu0 %v835
      %v837 = vpop.xlane.xlu0 %836
      %v838 = vadd.f32 %v833, %v834
      %839 = vadd.xlane.f32.xlu0 %v838
      %v840 = vpop.xlane.xlu0 %839
      %v841 = vrcp.pop 256.0
      %v842 = vmul.f32 %v837, %v841
      %v843 = vmul.f32 %v840, %v841
      %v844 = vmax.f32 %v831, %v832
      %845 = vmax.xlane.f32.xlu0 %v844
      %v846 = vpop.xlane.xlu0 %845
      %v847 = vmax.f32 %v833, %v834
      %848 = vmax.xlane.f32.xlu0 %v847
      %v849 = vpop.xlane.xlu0 %848
      %vm850 = vcmp.eq.s32.totalorder %v281, 0
      %v851 = vsel %vm850, %v842, %v846
      %v852 = vsel %vm850, %v843, %v849
      %v853 = vld [vmem:[%s4] sm:$0x1]
      %v855 = vsel %vm395, %v853, 0
      %857 = vmatprep.subr.mxu0 0.0
      %858 = vmatpush1.msra.mxu0 %v851
      %859 = vmatprep.subr.mxu0 0.0
      %860 = vmatpush1.msra.mxu0 %v852
      %861 = vmatprep.subr.mxu0 0.0
      %862 = vmatpush1.msra.mxu0 0.0
      %863 = vmatprep.subr.mxu0 0.0
      %864 = vmatpush1.msra.mxu0 0.0
      %865 = vmatprep.subr.mxu0 0.0
      %866 = vmatpush1.msra.mxu0 0.0
      %867 = vmatprep.subr.mxu0 0.0
      %868 = vmatpush1.msra.mxu0 0.0
      %869 = vmatprep.subr.mxu0 0.0
      %870 = vmatpush1.msra.mxu0 0.0
      %871 = vmatprep.subr.mxu0 0.0
      %872 = vmatpush1.msra.mxu0 0.0
      %873 = vmatprep.subr.mxu0 0.0
      %874 = vmatpush1.msra.mxu0 0.0
      %875 = vmatprep.subr.mxu0 0.0
      %876 = vmatpush1.msra.mxu0 0.0
      %877 = vmatprep.subr.mxu0 0.0
      %878 = vmatpush1.msra.mxu0 0.0
      %879 = vmatprep.subr.mxu0 0.0
      %880 = vmatpush1.msra.mxu0 0.0
      %881 = vmatprep.subr.mxu0 0.0
      %882 = vmatpush1.msra.mxu0 0.0
      %883 = vmatprep.subr.mxu0 0.0
      %884 = vmatpush1.msra.mxu0 0.0
      %885 = vmatprep.subr.mxu0 0.0
      %886 = vmatpush1.msra.mxu0 0.0
      %887 = vmatprep.subr.mxu0 0.0
      %888 = vmatpush1.msra.mxu0 0.0
      %889 = vmatprep.subr.mxu0 0.0
      %890 = vmatpush1.msra.mxu0 0.0
      %891 = vmatprep.subr.mxu0 0.0
      %892 = vmatpush1.msra.mxu0 0.0
      %893 = vmatprep.subr.mxu0 0.0
      %894 = vmatpush1.msra.mxu0 0.0
      %895 = vmatprep.subr.mxu0 0.0
      %896 = vmatpush1.msra.mxu0 0.0
      %897 = vmatprep.subr.mxu0 0.0
      %898 = vmatpush1.msra.mxu0 0.0
      %899 = vmatprep.subr.mxu0 0.0
      %900 = vmatpush1.msra.mxu0 0.0
      %901 = vmatprep.subr.mxu0 0.0
      %902 = vmatpush1.msra.mxu0 0.0
      %903 = vmatprep.subr.mxu0 0.0
      %904 = vmatpush1.msra.mxu0 0.0
      %905 = vmatprep.subr.mxu0 0.0
      %906 = vmatpush1.msra.mxu0 0.0
      %907 = vmatprep.subr.mxu0 0.0
      %908 = vmatpush1.msra.mxu0 0.0
      %909 = vmatprep.subr.mxu0 0.0
      %910 = vmatpush1.msra.mxu0 0.0
      %911 = vmatprep.subr.mxu0 0.0
      %912 = vmatpush1.msra.mxu0 0.0
      %913 = vmatprep.subr.mxu0 0.0
      %914 = vmatpush1.msra.mxu0 0.0
      %915 = vmatprep.subr.mxu0 0.0
      %916 = vmatpush1.msra.mxu0 0.0
      %917 = vmatprep.subr.mxu0 0.0
      %918 = vmatpush1.msra.mxu0 0.0
      %919 = vmatprep.subr.mxu0 0.0
      %920 = vmatpush1.msra.mxu0 0.0
      %921 = vmatprep.mubr.f32.mxu0 0.0
      %922 = vmatmul.mubr.f32.gmra.mrb[0].mxu0 %v855
      %v923 = vpop.f32.mrb[0].mxu0
      %v924 = vadd.f32 0.0, %v923
      %v925 = vpop.f32.mrb[0].mxu0
      %926 = vdwg.mxu0
      %v927 = vmax.f32 %v924, 0.0
      %v928 = vld [vmem:[%s5] sm:$0xff]
      %v929 = vld [vmem:[%s5 + $0x8] sm:$0xff]
      %v931 = vsel %vm425, %v928, 0
      %v934 = vsel %vm425, %v929, 0
      %vm936 = vcmask 1040384
      %v938 = vsel %vm936, %v927, 0
      %940 = vmatprep.subr.mxu0 0.0
      %941 = vmatpush1.msra.mxu0 %v938
      %942 = vmatprep.subr.mxu0 0.0
      %943 = vmatpush1.msra.mxu0 0.0
      %944 = vmatprep.subr.mxu0 0.0
      %945 = vmatpush1.msra.mxu0 0.0
      %946 = vmatprep.subr.mxu0 0.0
      %947 = vmatpush1.msra.mxu0 0.0
      %948 = vmatprep.subr.mxu0 0.0
      %949 = vmatpush1.msra.mxu0 0.0
      %950 = vmatprep.subr.mxu0 0.0
      %951 = vmatpush1.msra.mxu0 0.0
      %952 = vmatprep.subr.mxu0 0.0
      %953 = vmatpush1.msra.mxu0 0.0
      %954 = vmatprep.subr.mxu0 0.0
      %955 = vmatpush1.msra.mxu0 0.0
      %956 = vmatprep.subr.mxu0 0.0
      %957 = vmatpush1.msra.mxu0 0.0
      %958 = vmatprep.subr.mxu0 0.0
      %959 = vmatpush1.msra.mxu0 0.0
      %960 = vmatprep.subr.mxu0 0.0
      %961 = vmatpush1.msra.mxu0 0.0
      %962 = vmatprep.subr.mxu0 0.0
      %963 = vmatpush1.msra.mxu0 0.0
      %964 = vmatprep.subr.mxu0 0.0
      %965 = vmatpush1.msra.mxu0 0.0
      %966 = vmatprep.subr.mxu0 0.0
      %967 = vmatpush1.msra.mxu0 0.0
      %968 = vmatprep.subr.mxu0 0.0
      %969 = vmatpush1.msra.mxu0 0.0
      %970 = vmatprep.subr.mxu0 0.0
      %971 = vmatpush1.msra.mxu0 0.0
      %972 = vmatprep.subr.mxu0 0.0
      %973 = vmatpush1.msra.mxu0 0.0
      %974 = vmatprep.subr.mxu0 0.0
      %975 = vmatpush1.msra.mxu0 0.0
      %976 = vmatprep.subr.mxu0 0.0
      %977 = vmatpush1.msra.mxu0 0.0
      %978 = vmatprep.subr.mxu0 0.0
      %979 = vmatpush1.msra.mxu0 0.0
      %980 = vmatprep.subr.mxu0 0.0
      %981 = vmatpush1.msra.mxu0 0.0
      %982 = vmatprep.subr.mxu0 0.0
      %983 = vmatpush1.msra.mxu0 0.0
      %984 = vmatprep.subr.mxu0 0.0
      %985 = vmatpush1.msra.mxu0 0.0
      %986 = vmatprep.subr.mxu0 0.0
      %987 = vmatpush1.msra.mxu0 0.0
      %988 = vmatprep.subr.mxu0 0.0
      %989 = vmatpush1.msra.mxu0 0.0
      %990 = vmatprep.subr.mxu0 0.0
      %991 = vmatpush1.msra.mxu0 0.0
      %992 = vmatprep.subr.mxu0 0.0
      %993 = vmatpush1.msra.mxu0 0.0
      %994 = vmatprep.subr.mxu0 0.0
      %995 = vmatpush1.msra.mxu0 0.0
      %996 = vmatprep.subr.mxu0 0.0
      %997 = vmatpush1.msra.mxu0 0.0
      %998 = vmatprep.subr.mxu0 0.0
      %999 = vmatpush1.msra.mxu0 0.0
      %1000 = vmatprep.subr.mxu0 0.0
      %1001 = vmatpush1.msra.mxu0 0.0
      %1002 = vmatprep.subr.mxu0 0.0
      %1003 = vmatpush1.msra.mxu0 0.0
      %1004 = vmatprep.mubr.f32.mxu0 0.0
      %1005 = vmatmul.mubr.f32.gmra.mrb[0].mxu0 %v931
      %v1006 = vpop.f32.mrb[0].mxu0
      %v1007 = vadd.f32 0.0, %v1006
      %v1008 = vpop.f32.mrb[0].mxu0
      %1009 = vmatprep.mubr.f32.mxu0 0.0
      %1010 = vmatmul.mubr.f32.gmra.mrb[0].mxu0 %v934
      %v1011 = vpop.f32.mrb[0].mxu0
      %v1012 = vadd.f32 0.0, %v1011
      %v1013 = vpop.f32.mrb[0].mxu0
      %1014 = vdwg.mxu0
      %1017 = vrot.lane.b32.xlu0 %v1007, 127
      %v1018 = vpop.permute.xlu0 %1017
      %1019 = vrot.lane.b32.xlu0 %v1012, 127
      %v1020 = vpop.permute.xlu0 %1019
      %v1023 = vadd.f32 %v1007, %v1018
      %v1024 = vadd.f32 %v1012, %v1020
      %v1025 = vxor.u32 %v1023, 2147483648
      %v1026 = vxor.u32 %v1024, 2147483648
      %v1027 = vmul.f32 %v1025, 1.442695
      %v1028 = vpow.pop %v1027
      %v1029 = vmul.f32 %v1026, 1.442695
      %v1030 = vpow.pop %v1029
      %v1031 = vadd.f32 %v1028, 1.0
      %v1032 = vadd.f32 %v1030, 1.0
      %v1033 = vrcp.pop %v1031
      %v1034 = vmul.f32 1.0, %v1033
      %v1035 = vrcp.pop %v1032
      %v1036 = vmul.f32 1.0, %v1035
      %1038 = vset.pattern.permute.xlu0 0
      %1039 = vperm.xlu0 %1038, %v1034
      %v1040 = vpop.permute.xlu0 %1039
      %1043 = vset.pattern.permute.xlu0 0
      %1044 = vperm.xlu0 %1043, %v1036
      %v1045 = vpop.permute.xlu0 %1044
      %v1047 = vmul.f32 %v831, %v1040
      %v1048 = vmul.f32 %v832, %v1040
      %v1049 = vmul.f32 %v833, %v1045
      %v1050 = vmul.f32 %v834, %v1045
      %v1051 = vlaneseq
      %v1052 = vshrl.u32 %v1051, 7
      %vm1053 = vcmp.eq.s32.totalorder %v1052, 0
      %v1054 = vadd.f32 %v1047, %v1049
      %v1055 = vrot.slane %v1054, 4
      %v1056 = vadd.f32 %v1054, %v1055
      %v1057 = vrot.slane %v1056, 2
      %v1058 = vadd.f32 %v1056, %v1057
      %v1059 = vrot.slane %v1058, 1
      %v1060 = vadd.f32 %v1058, %v1059
      %v1061 = vadd.f32 %v1048, %v1050
      %v1062 = vrot.slane %v1061, 4
      %v1063 = vadd.f32 %v1061, %v1062
      %v1064 = vrot.slane %v1063, 2
      %v1065 = vadd.f32 %v1063, %v1064
      %v1066 = vrot.slane %v1065, 1
      %v1067 = vadd.f32 %v1065, %v1066
      %v1068 = vrcp.pop 16.0
      %v1069 = vmul.f32 %v1060, %v1068
      %v1070 = vmul.f32 %v1067, %v1068
      %vm1071 = vcmp.eq.s32.totalorder %v1052, 1
      %v1072 = vmax.f32 %v1047, %v1049
      %v1073 = vrot.slane %v1072, 4
      %v1074 = vmax.f32 %v1072, %v1073
      %v1075 = vrot.slane %v1074, 2
      %v1076 = vmax.f32 %v1074, %v1075
      %v1077 = vrot.slane %v1076, 1
      %v1078 = vmax.f32 %v1076, %v1077
      %v1079 = vmax.f32 %v1048, %v1050
      %v1080 = vrot.slane %v1079, 4
      %v1081 = vmax.f32 %v1079, %v1080
      %v1082 = vrot.slane %v1081, 2
      %v1083 = vmax.f32 %v1081, %v1082
      %v1084 = vrot.slane %v1083, 1
      %v1085 = vmax.f32 %v1083, %v1084
      %v1086 = vsel %vm1071, %v1078, 0.0
      %v1087 = vsel %vm1071, %v1085, 0.0
      %v1088 = vsel %vm1053, %v1069, %v1086
      %v1089 = vsel %vm1053, %v1070, %v1087
      %v1090 = vsel %vm313, 1, 0
      %v1091 = vsel %vm314, 1, 0
      %vm1092 = vcmp.eq.s32.totalorder %v1090, 1
      %vm1093 = vcmp.eq.s32.totalorder %v1091, 1
      %1096 = vrot.lane.b32.xlu0 0.0, 51
      %v1097 = vpop.permute.xlu0 %1096
      %1098 = vrot.lane.b32.xlu0 %v1088, 51
      %v1099 = vpop.permute.xlu0 %1098
      %1100 = vrot.lane.b32.xlu0 %v1089, 51
      %v1101 = vpop.permute.xlu0 %1100
      %vm1102 = vcmask 416768
      %v1103 = vsel %vm1102, %v1097, %v1099
      %v1104 = vsel %vm1102, %v1099, %v1101
      %v1107 = vsel %vm1092, %v1103, 0.0
      %v1108 = vsel %vm1093, %v1104, 0.0
      %v1109 = vsel %vm321, 1, 0
      %v1110 = vsel %vm322, 1, 0
      %vm1111 = vcmp.eq.s32.totalorder %v1109, 1
      %vm1112 = vcmp.eq.s32.totalorder %v1110, 1
      %1113 = vrot.lane.b32.xlu0 0.0, 50
      %v1114 = vpop.permute.xlu0 %1113
      %1115 = vrot.lane.b32.xlu0 %v1088, 50
      %v1116 = vpop.permute.xlu0 %1115
      %1117 = vrot.lane.b32.xlu0 %v1089, 50
      %v1118 = vpop.permute.xlu0 %1117
      %vm1119 = vcmask 408576
      %v1120 = vsel %vm1119, %v1114, %v1116
      %v1121 = vsel %vm1119, %v1116, %v1118
      %v1124 = vsel %vm1111, %v1120, 0.0
      %v1125 = vsel %vm1112, %v1121, 0.0
      %1126 = vrot.lane.b32.xlu0 0.0, 49
      %v1127 = vpop.permute.xlu0 %1126
      %1128 = vrot.lane.b32.xlu0 %v1088, 49
      %v1129 = vpop.permute.xlu0 %1128
      %1130 = vrot.lane.b32.xlu0 %v1089, 49
      %v1131 = vpop.permute.xlu0 %1130
      %vm1132 = vcmask 400384
      %v1133 = vsel %vm1132, %v1127, %v1129
      %v1134 = vsel %vm1132, %v1129, %v1131
      %v1137 = vsel %vm367, %v1133, 0.0
      %v1138 = vsel %vm368, %v1134, 0.0
      %1139 = vrot.lane.b32.xlu0 0.0, 48
      %v1140 = vpop.permute.xlu0 %1139
      %1141 = vrot.lane.b32.xlu0 %v1088, 48
      %v1142 = vpop.permute.xlu0 %1141
      %1143 = vrot.lane.b32.xlu0 %v1089, 48
      %v1144 = vpop.permute.xlu0 %1143
      %vm1145 = vcmask 392192
      %v1146 = vsel %vm1145, %v1140, %v1142
      %v1147 = vsel %vm1145, %v1142, %v1144
      %v1150 = vsel %vm387, %v1146, 0.0
      %v1151 = vsel %vm388, %v1147, 0.0
      %1152 = vrot.lane.b32.xlu0 0.0, 47
      %v1153 = vpop.permute.xlu0 %1152
      %1154 = vrot.lane.b32.xlu0 %v1088, 47
      %v1155 = vpop.permute.xlu0 %1154
      %1156 = vrot.lane.b32.xlu0 %v1089, 47
      %v1157 = vpop.permute.xlu0 %1156
      %vm1158 = vcmask 384000
      %v1159 = vsel %vm1158, %v1153, %v1155
      %v1160 = vsel %vm1158, %v1155, %v1157
      %v1163 = vsel %vm404, %v1159, 0.0
      %v1164 = vsel %vm405, %v1160, 0.0
      %v1165 = vsel %vm351, 1, 0
      %v1166 = vsel %vm352, 1, 0
      %vm1167 = vcmp.eq.s32.totalorder %v1165, 1
      %vm1168 = vcmp.eq.s32.totalorder %v1166, 1
      %1169 = vrot.lane.b32.xlu0 0.0, 46
      %v1170 = vpop.permute.xlu0 %1169
      %1171 = vrot.lane.b32.xlu0 %v1088, 46
      %v1172 = vpop.permute.xlu0 %1171
      %1173 = vrot.lane.b32.xlu0 %v1089, 46
      %v1174 = vpop.permute.xlu0 %1173
      %vm1175 = vcmask 375808
      %v1176 = vsel %vm1175, %v1170, %v1172
      %v1177 = vsel %vm1175, %v1172, %v1174
      %v1180 = vsel %vm1167, %v1176, 0.0
      %v1181 = vsel %vm1168, %v1177, 0.0
      %v1182 = vsel %vm359, 1, 0
      %v1183 = vsel %vm360, 1, 0
      %vm1184 = vcmp.eq.s32.totalorder %v1182, 1
      %vm1185 = vcmp.eq.s32.totalorder %v1183, 1
      %1186 = vrot.lane.b32.xlu0 0.0, 45
      %v1187 = vpop.permute.xlu0 %1186
      %1188 = vrot.lane.b32.xlu0 %v1088, 45
      %v1189 = vpop.permute.xlu0 %1188
      %1190 = vrot.lane.b32.xlu0 %v1089, 45
      %v1191 = vpop.permute.xlu0 %1190
      %vm1192 = vcmask 367616
      %v1193 = vsel %vm1192, %v1187, %v1189
      %v1194 = vsel %vm1192, %v1189, %v1191
      %v1197 = vsel %vm1184, %v1193, 0.0
      %v1198 = vsel %vm1185, %v1194, 0.0
      %1199 = vrot.lane.b32.xlu0 0.0, 35
      %v1200 = vpop.permute.xlu0 %1199
      %1201 = vrot.lane.b32.xlu0 %v1088, 35
      %v1202 = vpop.permute.xlu0 %1201
      %1203 = vrot.lane.b32.xlu0 %v1089, 35
      %v1204 = vpop.permute.xlu0 %1203
      %vm1205 = vcmask 285696
      %v1206 = vsel %vm1205, %v1200, %v1202
      %v1207 = vsel %vm1205, %v1202, %v1204
      %v1210 = vsel %vm1092, %v1206, 0.0
      %v1211 = vsel %vm1093, %v1207, 0.0
      %1212 = vrot.lane.b32.xlu0 0.0, 34
      %v1213 = vpop.permute.xlu0 %1212
      %1214 = vrot.lane.b32.xlu0 %v1088, 34
      %v1215 = vpop.permute.xlu0 %1214
      %1216 = vrot.lane.b32.xlu0 %v1089, 34
      %v1217 = vpop.permute.xlu0 %1216
      %vm1218 = vcmask 277504
      %v1219 = vsel %vm1218, %v1213, %v1215
      %v1220 = vsel %vm1218, %v1215, %v1217
      %v1223 = vsel %vm1111, %v1219, 0.0
      %v1224 = vsel %vm1112, %v1220, 0.0
      %1225 = vrot.lane.b32.xlu0 0.0, 33
      %v1226 = vpop.permute.xlu0 %1225
      %1227 = vrot.lane.b32.xlu0 %v1088, 33
      %v1228 = vpop.permute.xlu0 %1227
      %1229 = vrot.lane.b32.xlu0 %v1089, 33
      %v1230 = vpop.permute.xlu0 %1229
      %vm1231 = vcmask 269312
      %v1232 = vsel %vm1231, %v1226, %v1228
      %v1233 = vsel %vm1231, %v1228, %v1230
      %v1236 = vsel %vm367, %v1232, 0.0
      %v1237 = vsel %vm368, %v1233, 0.0
      %1238 = vrot.lane.b32.xlu0 0.0, 32
      %v1239 = vpop.permute.xlu0 %1238
      %1240 = vrot.lane.b32.xlu0 %v1088, 32
      %v1241 = vpop.permute.xlu0 %1240
      %1242 = vrot.lane.b32.xlu0 %v1089, 32
      %v1243 = vpop.permute.xlu0 %1242
      %vm1244 = vcmask 261120
      %v1245 = vsel %vm1244, %v1239, %v1241
      %v1246 = vsel %vm1244, %v1241, %v1243
      %v1249 = vsel %vm387, %v1245, 0.0
      %v1250 = vsel %vm388, %v1246, 0.0
      %1251 = vrot.lane.b32.xlu0 0.0, 31
      %v1252 = vpop.permute.xlu0 %1251
      %1253 = vrot.lane.b32.xlu0 %v1088, 31
      %v1254 = vpop.permute.xlu0 %1253
      %1255 = vrot.lane.b32.xlu0 %v1089, 31
      %v1256 = vpop.permute.xlu0 %1255
      %vm1257 = vcmask 252928
      %v1258 = vsel %vm1257, %v1252, %v1254
      %v1259 = vsel %vm1257, %v1254, %v1256
      %v1262 = vsel %vm404, %v1258, 0.0
      %v1263 = vsel %vm405, %v1259, 0.0
      %1264 = vrot.lane.b32.xlu0 0.0, 30
      %v1265 = vpop.permute.xlu0 %1264
      %1266 = vrot.lane.b32.xlu0 %v1088, 30
      %v1267 = vpop.permute.xlu0 %1266
      %1268 = vrot.lane.b32.xlu0 %v1089, 30
      %v1269 = vpop.permute.xlu0 %1268
      %vm1270 = vcmask 244736
      %v1271 = vsel %vm1270, %v1265, %v1267
      %v1272 = vsel %vm1270, %v1267, %v1269
      %v1275 = vsel %vm1167, %v1271, 0.0
      %v1276 = vsel %vm1168, %v1272, 0.0
      %1277 = vrot.lane.b32.xlu0 0.0, 29
      %v1278 = vpop.permute.xlu0 %1277
      %1279 = vrot.lane.b32.xlu0 %v1088, 29
      %v1280 = vpop.permute.xlu0 %1279
      %1281 = vrot.lane.b32.xlu0 %v1089, 29
      %v1282 = vpop.permute.xlu0 %1281
      %vm1283 = vcmask 236544
      %v1284 = vsel %vm1283, %v1278, %v1280
      %v1285 = vsel %vm1283, %v1280, %v1282
      %v1288 = vsel %vm1184, %v1284, 0.0
      %v1289 = vsel %vm1185, %v1285, 0.0
      %1290 = vrot.lane.b32.xlu0 0.0, 19
      %v1291 = vpop.permute.xlu0 %1290
      %1292 = vrot.lane.b32.xlu0 %v1088, 19
      %v1293 = vpop.permute.xlu0 %1292
      %1294 = vrot.lane.b32.xlu0 %v1089, 19
      %v1295 = vpop.permute.xlu0 %1294
      %vm1296 = vcmask 154624
      %v1297 = vsel %vm1296, %v1291, %v1293
      %v1298 = vsel %vm1296, %v1293, %v1295
      %v1301 = vsel %vm1092, %v1297, 0.0
      %v1302 = vsel %vm1093, %v1298, 0.0
      %1303 = vrot.lane.b32.xlu0 0.0, 18
      %v1304 = vpop.permute.xlu0 %1303
      %1305 = vrot.lane.b32.xlu0 %v1088, 18
      %v1306 = vpop.permute.xlu0 %1305
      %1307 = vrot.lane.b32.xlu0 %v1089, 18
      %v1308 = vpop.permute.xlu0 %1307
      %vm1309 = vcmask 146432
      %v1310 = vsel %vm1309, %v1304, %v1306
      %v1311 = vsel %vm1309, %v1306, %v1308
      %v1314 = vsel %vm1111, %v1310, 0.0
      %v1315 = vsel %vm1112, %v1311, 0.0
      %1316 = vrot.lane.b32.xlu0 %v1088, 17
      %v1317 = vpop.permute.xlu0 %1316
      %1318 = vrot.lane.b32.xlu0 %v1089, 17
      %v1319 = vpop.permute.xlu0 %1318
      %v1320 = vsel %vm378, %v373, %v1317
      %v1321 = vsel %vm378, %v1317, %v1319
      %v1324 = vsel %vm367, %v1320, 0.0
      %v1325 = vsel %vm368, %v1321, 0.0
      %1326 = vrot.lane.b32.xlu0 %v1088, 16
      %v1327 = vpop.permute.xlu0 %1326
      %1328 = vrot.lane.b32.xlu0 %v1089, 16
      %v1329 = vpop.permute.xlu0 %1328
      %v1330 = vsel %vm395, %v390, %v1327
      %v1331 = vsel %vm395, %v1327, %v1329
      %v1334 = vsel %vm387, %v1330, 0.0
      %v1335 = vsel %vm388, %v1331, 0.0
      %1336 = vrot.lane.b32.xlu0 %v1088, 15
      %v1337 = vpop.permute.xlu0 %1336
      %1338 = vrot.lane.b32.xlu0 %v1089, 15
      %v1339 = vpop.permute.xlu0 %1338
      %v1340 = vsel %vm412, %v407, %v1337
      %v1341 = vsel %vm412, %v1337, %v1339
      %v1344 = vsel %vm404, %v1340, 0.0
      %v1345 = vsel %vm405, %v1341, 0.0
      %1346 = vrot.lane.b32.xlu0 0.0, 14
      %v1347 = vpop.permute.xlu0 %1346
      %1348 = vrot.lane.b32.xlu0 %v1088, 14
      %v1349 = vpop.permute.xlu0 %1348
      %1350 = vrot.lane.b32.xlu0 %v1089, 14
      %v1351 = vpop.permute.xlu0 %1350
      %vm1352 = vcmask 113664
      %v1353 = vsel %vm1352, %v1347, %v1349
      %v1354 = vsel %vm1352, %v1349, %v1351
      %v1357 = vsel %vm1167, %v1353, 0.0
      %v1358 = vsel %vm1168, %v1354, 0.0
      %1359 = vrot.lane.b32.xlu0 0.0, 13
      %v1360 = vpop.permute.xlu0 %1359
      %1361 = vrot.lane.b32.xlu0 %v1088, 13
      %v1362 = vpop.permute.xlu0 %1361
      %1363 = vrot.lane.b32.xlu0 %v1089, 13
      %v1364 = vpop.permute.xlu0 %1363
      %vm1365 = vcmask 105472
      %v1366 = vsel %vm1365, %v1360, %v1362
      %v1367 = vsel %vm1365, %v1362, %v1364
      %v1370 = vsel %vm1184, %v1366, 0.0
      %v1371 = vsel %vm1185, %v1367, 0.0
      %1372 = vrot.lane.b32.xlu0 0.0, 3
      %v1373 = vpop.permute.xlu0 %1372
      %1374 = vrot.lane.b32.xlu0 %v1088, 3
      %v1375 = vpop.permute.xlu0 %1374
      %1376 = vrot.lane.b32.xlu0 %v1089, 3
      %v1377 = vpop.permute.xlu0 %1376
      %vm1378 = vcmask 23552
      %v1379 = vsel %vm1378, %v1373, %v1375
      %v1380 = vsel %vm1378, %v1375, %v1377
      %v1383 = vsel %vm1092, %v1379, 0.0
      %v1384 = vsel %vm1093, %v1380, 0.0
      %1385 = vrot.lane.b32.xlu0 0.0, 2
      %v1386 = vpop.permute.xlu0 %1385
      %1387 = vrot.lane.b32.xlu0 %v1088, 2
      %v1388 = vpop.permute.xlu0 %1387
      %1389 = vrot.lane.b32.xlu0 %v1089, 2
      %v1390 = vpop.permute.xlu0 %1389
      %vm1391 = vcmask 15360
      %v1392 = vsel %vm1391, %v1386, %v1388
      %v1393 = vsel %vm1391, %v1388, %v1390
      %v1396 = vsel %vm1111, %v1392, 0.0
      %v1397 = vsel %vm1112, %v1393, 0.0
      %1398 = vrot.lane.b32.xlu0 %v1088, 1
      %v1399 = vpop.permute.xlu0 %1398
      %1400 = vrot.lane.b32.xlu0 %v1089, 1
      %v1401 = vpop.permute.xlu0 %1400
      %v1402 = vsel %vm425, %v420, %v1399
      %v1403 = vsel %vm425, %v1399, %v1401
      %v1406 = vsel %vm367, %v1402, 0.0
      %v1407 = vsel %vm368, %v1403, 0.0
      %v1408 = vsel %vm387, %v1088, 0.0
      %v1409 = vsel %vm388, %v1089, 0.0
      %1410 = vrot.lane.b32.xlu0 %v1088, 127
      %v1411 = vpop.permute.xlu0 %1410
      %1412 = vrot.lane.b32.xlu0 %v1089, 127
      %v1413 = vpop.permute.xlu0 %1412
      %v1414 = vsel %vm440, %v1411, %v1413
      %v1415 = vsel %vm440, %v1413, %v439
      %v1418 = vsel %vm404, %v1414, 0.0
      %v1419 = vsel %vm405, %v1415, 0.0
      %1420 = vrot.lane.b32.xlu0 %v1088, 126
      %v1421 = vpop.permute.xlu0 %1420
      %1422 = vrot.lane.b32.xlu0 %v1089, 126
      %v1423 = vpop.permute.xlu0 %1422
      %1424 = vrot.lane.b32.xlu0 0.0, 126
      %v1425 = vpop.permute.xlu0 %1424
      %vm1426 = vcmask 1031168
      %v1427 = vsel %vm1426, %v1421, %v1423
      %v1428 = vsel %vm1426, %v1423, %v1425
      %v1431 = vsel %vm1167, %v1427, 0.0
      %v1432 = vsel %vm1168, %v1428, 0.0
      %1433 = vrot.lane.b32.xlu0 %v1088, 125
      %v1434 = vpop.permute.xlu0 %1433
      %1435 = vrot.lane.b32.xlu0 %v1089, 125
      %v1436 = vpop.permute.xlu0 %1435
      %1437 = vrot.lane.b32.xlu0 0.0, 125
      %v1438 = vpop.permute.xlu0 %1437
      %vm1439 = vcmask 1022976
      %v1440 = vsel %vm1439, %v1434, %v1436
      %v1441 = vsel %vm1439, %v1436, %v1438
      %v1444 = vsel %vm1184, %v1440, 0.0
      %v1445 = vsel %vm1185, %v1441, 0.0
      %1446 = vrot.lane.b32.xlu0 %v1088, 115
      %v1447 = vpop.permute.xlu0 %1446
      %1448 = vrot.lane.b32.xlu0 %v1089, 115
      %v1449 = vpop.permute.xlu0 %1448
      %1450 = vrot.lane.b32.xlu0 0.0, 115
      %v1451 = vpop.permute.xlu0 %1450
      %vm1452 = vcmask 941056
      %v1453 = vsel %vm1452, %v1447, %v1449
      %v1454 = vsel %vm1452, %v1449, %v1451
      %v1457 = vsel %vm1092, %v1453, 0.0
      %v1458 = vsel %vm1093, %v1454, 0.0
      %1459 = vrot.lane.b32.xlu0 %v1088, 114
      %v1460 = vpop.permute.xlu0 %1459
      %1461 = vrot.lane.b32.xlu0 %v1089, 114
      %v1462 = vpop.permute.xlu0 %1461
      %1463 = vrot.lane.b32.xlu0 0.0, 114
      %v1464 = vpop.permute.xlu0 %1463
      %vm1465 = vcmask 932864
      %v1466 = vsel %vm1465, %v1460, %v1462
      %v1467 = vsel %vm1465, %v1462, %v1464
      %v1470 = vsel %vm1111, %v1466, 0.0
      %v1471 = vsel %vm1112, %v1467, 0.0
      %1472 = vrot.lane.b32.xlu0 %v1088, 113
      %v1473 = vpop.permute.xlu0 %1472
      %1474 = vrot.lane.b32.xlu0 %v1089, 113
      %v1475 = vpop.permute.xlu0 %1474
      %v1476 = vsel %vm453, %v1473, %v1475
      %v1477 = vsel %vm453, %v1475, %v452
      %v1480 = vsel %vm367, %v1476, 0.0
      %v1481 = vsel %vm368, %v1477, 0.0
      %1482 = vrot.lane.b32.xlu0 %v1088, 112
      %v1483 = vpop.permute.xlu0 %1482
      %1484 = vrot.lane.b32.xlu0 %v1089, 112
      %v1485 = vpop.permute.xlu0 %1484
      %v1486 = vsel %vm466, %v1483, %v1485
      %v1487 = vsel %vm466, %v1485, %v465
      %v1490 = vsel %vm387, %v1486, 0.0
      %v1491 = vsel %vm388, %v1487, 0.0
      %1492 = vrot.lane.b32.xlu0 %v1088, 111
      %v1493 = vpop.permute.xlu0 %1492
      %1494 = vrot.lane.b32.xlu0 %v1089, 111
      %v1495 = vpop.permute.xlu0 %1494
      %v1496 = vsel %vm479, %v1493, %v1495
      %v1497 = vsel %vm479, %v1495, %v478
      %v1500 = vsel %vm404, %v1496, 0.0
      %v1501 = vsel %vm405, %v1497, 0.0
      %1502 = vrot.lane.b32.xlu0 %v1088, 110
      %v1503 = vpop.permute.xlu0 %1502
      %1504 = vrot.lane.b32.xlu0 %v1089, 110
      %v1505 = vpop.permute.xlu0 %1504
      %1506 = vrot.lane.b32.xlu0 0.0, 110
      %v1507 = vpop.permute.xlu0 %1506
      %vm1508 = vcmask 900096
      %v1509 = vsel %vm1508, %v1503, %v1505
      %v1510 = vsel %vm1508, %v1505, %v1507
      %v1513 = vsel %vm1167, %v1509, 0.0
      %v1514 = vsel %vm1168, %v1510, 0.0
      %1515 = vrot.lane.b32.xlu0 %v1088, 109
      %v1516 = vpop.permute.xlu0 %1515
      %1517 = vrot.lane.b32.xlu0 %v1089, 109
      %v1518 = vpop.permute.xlu0 %1517
      %1519 = vrot.lane.b32.xlu0 0.0, 109
      %v1520 = vpop.permute.xlu0 %1519
      %vm1521 = vcmask 891904
      %v1522 = vsel %vm1521, %v1516, %v1518
      %v1523 = vsel %vm1521, %v1518, %v1520
      %v1526 = vsel %vm1184, %v1522, 0.0
      %v1527 = vsel %vm1185, %v1523, 0.0
      %1528 = vrot.lane.b32.xlu0 %v1088, 99
      %v1529 = vpop.permute.xlu0 %1528
      %1530 = vrot.lane.b32.xlu0 %v1089, 99
      %v1531 = vpop.permute.xlu0 %1530
      %1532 = vrot.lane.b32.xlu0 0.0, 99
      %v1533 = vpop.permute.xlu0 %1532
      %vm1534 = vcmask 809984
      %v1535 = vsel %vm1534, %v1529, %v1531
      %v1536 = vsel %vm1534, %v1531, %v1533
      %v1539 = vsel %vm1092, %v1535, 0.0
      %v1540 = vsel %vm1093, %v1536, 0.0
      %1541 = vrot.lane.b32.xlu0 %v1088, 98
      %v1542 = vpop.permute.xlu0 %1541
      %1543 = vrot.lane.b32.xlu0 %v1089, 98
      %v1544 = vpop.permute.xlu0 %1543
      %1545 = vrot.lane.b32.xlu0 0.0, 98
      %v1546 = vpop.permute.xlu0 %1545
      %vm1547 = vcmask 801792
      %v1548 = vsel %vm1547, %v1542, %v1544
      %v1549 = vsel %vm1547, %v1544, %v1546
      %v1552 = vsel %vm1111, %v1548, 0.0
      %v1553 = vsel %vm1112, %v1549, 0.0
      %1554 = vrot.lane.b32.xlu0 %v1088, 97
      %v1555 = vpop.permute.xlu0 %1554
      %1556 = vrot.lane.b32.xlu0 %v1089, 97
      %v1557 = vpop.permute.xlu0 %1556
      %1558 = vrot.lane.b32.xlu0 0.0, 97
      %v1559 = vpop.permute.xlu0 %1558
      %vm1560 = vcmask 793600
      %v1561 = vsel %vm1560, %v1555, %v1557
      %v1562 = vsel %vm1560, %v1557, %v1559
      %v1565 = vsel %vm367, %v1561, 0.0
      %v1566 = vsel %vm368, %v1562, 0.0
      %1567 = vrot.lane.b32.xlu0 %v1088, 96
      %v1568 = vpop.permute.xlu0 %1567
      %1569 = vrot.lane.b32.xlu0 %v1089, 96
      %v1570 = vpop.permute.xlu0 %1569
      %1571 = vrot.lane.b32.xlu0 0.0, 96
      %v1572 = vpop.permute.xlu0 %1571
      %vm1573 = vcmask 785408
      %v1574 = vsel %vm1573, %v1568, %v1570
      %v1575 = vsel %vm1573, %v1570, %v1572
      %v1578 = vsel %vm387, %v1574, 0.0
      %v1579 = vsel %vm388, %v1575, 0.0
      %1580 = vrot.lane.b32.xlu0 %v1088, 95
      %v1581 = vpop.permute.xlu0 %1580
      %1582 = vrot.lane.b32.xlu0 %v1089, 95
      %v1583 = vpop.permute.xlu0 %1582
      %1584 = vrot.lane.b32.xlu0 0.0, 95
      %v1585 = vpop.permute.xlu0 %1584
      %vm1586 = vcmask 777216
      %v1587 = vsel %vm1586, %v1581, %v1583
      %v1588 = vsel %vm1586, %v1583, %v1585
      %v1591 = vsel %vm404, %v1587, 0.0
      %v1592 = vsel %vm405, %v1588, 0.0
      %1593 = vrot.lane.b32.xlu0 %v1088, 94
      %v1594 = vpop.permute.xlu0 %1593
      %1595 = vrot.lane.b32.xlu0 %v1089, 94
      %v1596 = vpop.permute.xlu0 %1595
      %1597 = vrot.lane.b32.xlu0 0.0, 94
      %v1598 = vpop.permute.xlu0 %1597
      %vm1599 = vcmask 769024
      %v1600 = vsel %vm1599, %v1594, %v1596
      %v1601 = vsel %vm1599, %v1596, %v1598
      %v1604 = vsel %vm1167, %v1600, 0.0
      %v1605 = vsel %vm1168, %v1601, 0.0
      %1606 = vrot.lane.b32.xlu0 %v1088, 93
      %v1607 = vpop.permute.xlu0 %1606
      %1608 = vrot.lane.b32.xlu0 %v1089, 93
      %v1609 = vpop.permute.xlu0 %1608
      %1610 = vrot.lane.b32.xlu0 0.0, 93
      %v1611 = vpop.permute.xlu0 %1610
      %vm1612 = vcmask 760832
      %v1613 = vsel %vm1612, %v1607, %v1609
      %v1614 = vsel %vm1612, %v1609, %v1611
      %v1617 = vsel %vm1184, %v1613, 0.0
      %v1618 = vsel %vm1185, %v1614, 0.0
      %1619 = vrot.lane.b32.xlu0 %v1088, 83
      %v1620 = vpop.permute.xlu0 %1619
      %1621 = vrot.lane.b32.xlu0 %v1089, 83
      %v1622 = vpop.permute.xlu0 %1621
      %1623 = vrot.lane.b32.xlu0 0.0, 83
      %v1624 = vpop.permute.xlu0 %1623
      %vm1625 = vcmask 678912
      %v1626 = vsel %vm1625, %v1620, %v1622
      %v1627 = vsel %vm1625, %v1622, %v1624
      %v1630 = vsel %vm1092, %v1626, 0.0
      %v1631 = vsel %vm1093, %v1627, 0.0
      %1632 = vrot.lane.b32.xlu0 %v1088, 82
      %v1633 = vpop.permute.xlu0 %1632
      %1634 = vrot.lane.b32.xlu0 %v1089, 82
      %v1635 = vpop.permute.xlu0 %1634
      %1636 = vrot.lane.b32.xlu0 0.0, 82
      %v1637 = vpop.permute.xlu0 %1636
      %vm1638 = vcmask 670720
      %v1639 = vsel %vm1638, %v1633, %v1635
      %v1640 = vsel %vm1638, %v1635, %v1637
      %v1643 = vsel %vm1111, %v1639, 0.0
      %v1644 = vsel %vm1112, %v1640, 0.0
      %1645 = vrot.lane.b32.xlu0 %v1088, 81
      %v1646 = vpop.permute.xlu0 %1645
      %1647 = vrot.lane.b32.xlu0 %v1089, 81
      %v1648 = vpop.permute.xlu0 %1647
      %1649 = vrot.lane.b32.xlu0 0.0, 81
      %v1650 = vpop.permute.xlu0 %1649
      %vm1651 = vcmask 662528
      %v1652 = vsel %vm1651, %v1646, %v1648
      %v1653 = vsel %vm1651, %v1648, %v1650
      %v1656 = vsel %vm367, %v1652, 0.0
      %v1657 = vsel %vm368, %v1653, 0.0
      %1658 = vrot.lane.b32.xlu0 %v1088, 80
      %v1659 = vpop.permute.xlu0 %1658
      %1660 = vrot.lane.b32.xlu0 %v1089, 80
      %v1661 = vpop.permute.xlu0 %1660
      %1662 = vrot.lane.b32.xlu0 0.0, 80
      %v1663 = vpop.permute.xlu0 %1662
      %vm1664 = vcmask 654336
      %v1665 = vsel %vm1664, %v1659, %v1661
      %v1666 = vsel %vm1664, %v1661, %v1663
      %v1669 = vsel %vm387, %v1665, 0.0
      %v1670 = vsel %vm388, %v1666, 0.0
      %1671 = vrot.lane.b32.xlu0 %v1088, 79
      %v1672 = vpop.permute.xlu0 %1671
      %1673 = vrot.lane.b32.xlu0 %v1089, 79
      %v1674 = vpop.permute.xlu0 %1673
      %1675 = vrot.lane.b32.xlu0 0.0, 79
      %v1676 = vpop.permute.xlu0 %1675
      %vm1677 = vcmask 646144
      %v1678 = vsel %vm1677, %v1672, %v1674
      %v1679 = vsel %vm1677, %v1674, %v1676
      %v1682 = vsel %vm404, %v1678, 0.0
      %v1683 = vsel %vm405, %v1679, 0.0
      %1684 = vrot.lane.b32.xlu0 %v1088, 78
      %v1685 = vpop.permute.xlu0 %1684
      %1686 = vrot.lane.b32.xlu0 %v1089, 78
      %v1687 = vpop.permute.xlu0 %1686
      %1688 = vrot.lane.b32.xlu0 0.0, 78
      %v1689 = vpop.permute.xlu0 %1688
      %vm1690 = vcmask 637952
      %v1691 = vsel %vm1690, %v1685, %v1687
      %v1692 = vsel %vm1690, %v1687, %v1689
      %v1695 = vsel %vm1167, %v1691, 0.0
      %v1696 = vsel %vm1168, %v1692, 0.0
      %1697 = vrot.lane.b32.xlu0 %v1088, 77
      %v1698 = vpop.permute.xlu0 %1697
      %1699 = vrot.lane.b32.xlu0 %v1089, 77
      %v1700 = vpop.permute.xlu0 %1699
      %1701 = vrot.lane.b32.xlu0 0.0, 77
      %v1702 = vpop.permute.xlu0 %1701
      %vm1703 = vcmask 629760
      %v1704 = vsel %vm1703, %v1698, %v1700
      %v1705 = vsel %vm1703, %v1700, %v1702
      %v1708 = vsel %vm1184, %v1704, 0.0
      %v1709 = vsel %vm1185, %v1705, 0.0
      %v1710 = vld [vmem:[%s6] sm:$0xf]
      %v1712 = vlaneseq
      %v1713 = vshrl.u32 %v1712, 7
      %v1714 = vsub.s32 0, %v1713
      %v1715 = vrot.slane %v1710, %v1714
      %v1716 = vlaneseq
      %v1717 = vshrl.u32 %v1716, 7
      %v1718 = vsub.s32 1, %v1717
      %v1719 = vrot.slane %v1710, %v1718
      %v1720 = vlaneseq
      %v1721 = vshrl.u32 %v1720, 7
      %v1722 = vsub.s32 2, %v1721
      %v1723 = vrot.slane %v1710, %v1722
      %v1724 = vlaneseq
      %v1725 = vshrl.u32 %v1724, 7
      %v1726 = vsub.s32 3, %v1725
      %v1727 = vrot.slane %v1710, %v1726
      %vm1731 = vcmask 64512
      %v1732 = vsel %vm1731, %v1727, 0
      %1734 = vmatprep.subr.mxu0 %v1108
      %1735 = vmatpush1.msra.mxu0 %v1107
      %1736 = vmatprep.subr.mxu0 %v1125
      %1737 = vmatpush1.msra.mxu0 %v1124
      %1738 = vmatprep.subr.mxu0 %v1138
      %1739 = vmatpush1.msra.mxu0 %v1137
      %1740 = vmatprep.subr.mxu0 %v1151
      %1741 = vmatpush1.msra.mxu0 %v1150
      %1742 = vmatprep.subr.mxu0 %v1164
      %1743 = vmatpush1.msra.mxu0 %v1163
      %1744 = vmatprep.subr.mxu0 %v1181
      %1745 = vmatpush1.msra.mxu0 %v1180
      %1746 = vmatprep.subr.mxu0 %v1198
      %1747 = vmatpush1.msra.mxu0 %v1197
      %1748 = vmatprep.subr.mxu0 %v1211
      %1749 = vmatpush1.msra.mxu0 %v1210
      %1750 = vmatprep.subr.mxu0 %v1224
      %1751 = vmatpush1.msra.mxu0 %v1223
      %1752 = vmatprep.subr.mxu0 %v1237
      %1753 = vmatpush1.msra.mxu0 %v1236
      %1754 = vmatprep.subr.mxu0 %v1250
      %1755 = vmatpush1.msra.mxu0 %v1249
      %1756 = vmatprep.subr.mxu0 %v1263
      %1757 = vmatpush1.msra.mxu0 %v1262
      %1758 = vmatprep.subr.mxu0 %v1276
      %1759 = vmatpush1.msra.mxu0 %v1275
      %1760 = vmatprep.subr.mxu0 %v1289
      %1761 = vmatpush1.msra.mxu0 %v1288
      %1762 = vmatprep.subr.mxu0 %v1302
      %1763 = vmatpush1.msra.mxu0 %v1301
      %1764 = vmatprep.subr.mxu0 %v1315
      %1765 = vmatpush1.msra.mxu0 %v1314
      %1766 = vmatprep.subr.mxu0 %v1325
      %1767 = vmatpush1.msra.mxu0 %v1324
      %1768 = vmatprep.subr.mxu0 %v1335
      %1769 = vmatpush1.msra.mxu0 %v1334
      %1770 = vmatprep.subr.mxu0 %v1345
      %1771 = vmatpush1.msra.mxu0 %v1344
      %1772 = vmatprep.subr.mxu0 %v1358
      %1773 = vmatpush1.msra.mxu0 %v1357
      %1774 = vmatprep.subr.mxu0 %v1371
      %1775 = vmatpush1.msra.mxu0 %v1370
      %1776 = vmatprep.subr.mxu0 %v1384
      %1777 = vmatpush1.msra.mxu0 %v1383
      %1778 = vmatprep.subr.mxu0 %v1397
      %1779 = vmatpush1.msra.mxu0 %v1396
      %1780 = vmatprep.subr.mxu0 %v1407
      %1781 = vmatpush1.msra.mxu0 %v1406
      %1782 = vmatprep.subr.mxu0 %v1409
      %1783 = vmatpush1.msra.mxu0 %v1408
      %1784 = vmatprep.subr.mxu0 %v1419
      %1785 = vmatpush1.msra.mxu0 %v1418
      %1786 = vmatprep.subr.mxu0 %v1432
      %1787 = vmatpush1.msra.mxu0 %v1431
      %1788 = vmatprep.subr.mxu0 %v1445
      %1789 = vmatpush1.msra.mxu0 %v1444
      %1790 = vmatprep.subr.mxu0 %v1458
      %1791 = vmatpush1.msra.mxu0 %v1457
      %1792 = vmatprep.subr.mxu0 %v1471
      %1793 = vmatpush1.msra.mxu0 %v1470
      %1794 = vmatprep.subr.mxu0 %v1481
      %1795 = vmatpush1.msra.mxu0 %v1480
      %1796 = vmatprep.subr.mxu0 %v1491
      %1797 = vmatpush1.msra.mxu0 %v1490
      %1798 = vmatprep.mubr.f32.mxu0 %v1719
      %1799 = vmatmul.mubr.f32.gmra.mrb[0].mxu0 %v1715
      %v1800 = vpop.f32.mrb[0].mxu0
      %v1801 = vadd.f32 0.0, %v1800
      %v1802 = vpop.f32.mrb[0].mxu0
      %v1803 = vadd.f32 0.0, %v1802
      %1804 = vdwg.mxu0
      %1805 = vmatprep.subr.mxu0 %v1501
      %1806 = vmatpush1.msra.mxu0 %v1500
      %1807 = vmatprep.subr.mxu0 %v1514
      %1808 = vmatpush1.msra.mxu0 %v1513
      %1809 = vmatprep.subr.mxu0 %v1527
      %1810 = vmatpush1.msra.mxu0 %v1526
      %1811 = vmatprep.subr.mxu0 %v1540
      %1812 = vmatpush1.msra.mxu0 %v1539
      %1813 = vmatprep.subr.mxu0 %v1553
      %1814 = vmatpush1.msra.mxu0 %v1552
      %1815 = vmatprep.subr.mxu0 %v1566
      %1816 = vmatpush1.msra.mxu0 %v1565
      %1817 = vmatprep.subr.mxu0 %v1579
      %1818 = vmatpush1.msra.mxu0 %v1578
      %1819 = vmatprep.subr.mxu0 %v1592
      %1820 = vmatpush1.msra.mxu0 %v1591
      %1821 = vmatprep.subr.mxu0 %v1605
      %1822 = vmatpush1.msra.mxu0 %v1604
      %1823 = vmatprep.subr.mxu0 %v1618
      %1824 = vmatpush1.msra.mxu0 %v1617
      %1825 = vmatprep.subr.mxu0 %v1631
      %1826 = vmatpush1.msra.mxu0 %v1630
      %1827 = vmatprep.subr.mxu0 %v1644
      %1828 = vmatpush1.msra.mxu0 %v1643
      %1829 = vmatprep.subr.mxu0 %v1657
      %1830 = vmatpush1.msra.mxu0 %v1656
      %1831 = vmatprep.subr.mxu0 %v1670
      %1832 = vmatpush1.msra.mxu0 %v1669
      %1833 = vmatprep.subr.mxu0 %v1683
      %1834 = vmatpush1.msra.mxu0 %v1682
      %1835 = vmatprep.subr.mxu0 %v1696
      %1836 = vmatpush1.msra.mxu0 %v1695
      %1837 = vmatprep.subr.mxu0 %v1709
      %1838 = vmatpush1.msra.mxu0 %v1708
      %1839 = vmatprep.subr.mxu0 0.0
      %1840 = vmatpush1.msra.mxu0 0.0
      %1841 = vmatprep.subr.mxu0 0.0
      %1842 = vmatpush1.msra.mxu0 0.0
      %1843 = vmatprep.subr.mxu0 0.0
      %1844 = vmatpush1.msra.mxu0 0.0
      %1845 = vmatprep.subr.mxu0 0.0
      %1846 = vmatpush1.msra.mxu0 0.0
      %1847 = vmatprep.subr.mxu0 0.0
      %1848 = vmatpush1.msra.mxu0 0.0
      %1849 = vmatprep.subr.mxu0 0.0
      %1850 = vmatpush1.msra.mxu0 0.0
      %1851 = vmatprep.subr.mxu0 0.0
      %1852 = vmatpush1.msra.mxu0 0.0
      %1853 = vmatprep.subr.mxu0 0.0
      %1854 = vmatpush1.msra.mxu0 0.0
      %1855 = vmatprep.subr.mxu0 0.0
      %1856 = vmatpush1.msra.mxu0 0.0
      %1857 = vmatprep.subr.mxu0 0.0
      %1858 = vmatpush1.msra.mxu0 0.0
      %1859 = vmatprep.subr.mxu0 0.0
      %1860 = vmatpush1.msra.mxu0 0.0
      %1861 = vmatprep.subr.mxu0 0.0
      %1862 = vmatpush1.msra.mxu0 0.0
      %1863 = vmatprep.subr.mxu0 0.0
      %1864 = vmatpush1.msra.mxu0 0.0
      %1865 = vmatprep.subr.mxu0 0.0
      %1866 = vmatpush1.msra.mxu0 0.0
      %1867 = vmatprep.subr.mxu0 0.0
      %1868 = vmatpush1.msra.mxu0 0.0
      %1869 = vmatprep.mubr.f32.mxu0 %v1732
      %1870 = vmatmul.mubr.f32.gmra.mrb[0].mxu0 %v1723
      %v1871 = vpop.f32.mrb[0].mxu0
      %v1872 = vadd.f32 %v1801, %v1871
      %v1873 = vpop.f32.mrb[0].mxu0
      %v1874 = vadd.f32 %v1803, %v1873
      %1875 = vdwg.mxu0
      %v1876 = vxor.u32 %v1872, 2147483648
      %v1877 = vxor.u32 %v1874, 2147483648
      %v1878 = vmul.f32 %v1876, 1.442695
      %v1879 = vpow.pop %v1878
      %v1880 = vmul.f32 %v1877, 1.442695
      %v1881 = vpow.pop %v1880
      %v1882 = vadd.f32 %v1879, 1.0
      %v1883 = vadd.f32 %v1881, 1.0
      %v1884 = vrcp.pop %v1882
      %v1885 = vmul.f32 1.0, %v1884
      %v1886 = vrcp.pop %v1883
      %v1887 = vmul.f32 1.0, %v1886
      %v1888 = vlaneseq
      %v1889 = vshrl.u32 %v1888, 7
      %v1890 = vsub.s32 0, %v1889
      %v1891 = vrot.slane %v1885, %v1890
      %v1892 = vlaneseq
      %v1893 = vshrl.u32 %v1892, 7
      %v1894 = vsub.s32 0, %v1893
      %v1895 = vrot.slane %v1887, %v1894
      %v1896 = vmul.f32 %v1047, %v1891
      %v1897 = vmul.f32 %v1048, %v1895
      %v1898 = vmul.f32 %v1049, %v1891
      %v1899 = vmul.f32 %v1050, %v1895
      %1900 = vst [vmem:[%s278] sm:$0xff] %v1896
      %1901 = vst [vmem:[%s278 + $0x8] sm:$0xff] %v1897
      %1902 = vst [vmem:[%s278 + $0x10] sm:$0xff] %v1898
      %1903 = vst [vmem:[%s278 + $0x18] sm:$0xff] %v1899
      %p1904 = scmp.lt.s32.totalorder %s18, 1
      %s1905 = scalar_select %p1904, %s18, 1
      %s1906 = smul.addr %s1905, 4
      %s1907 = smul.addr %s1906, 8
      %s1908 = scalar_lea.vmem %s7, %s1907
      // Predicated region
      $region49: #{attention_residual_block.1} parent=47 // pred_check
        %p1909 = pneg %p188
      $region50: #{attention_residual_block.1} parent=47 // pred_check_branch
        %1911 = sbr.rel (%p1909) target = $region52
      $region51: #{attention_residual_block.1} parent=47 // pred_region
        _
      $region52: #{attention_residual_block.1} parent=47 // pred_fallthru
        _
    $region48: #{attention_residual_block.1} parent=5 // pred_fallthru
      _
    %p1912 = scmp.le.s32.totalorder 2, %s13
    // Predicated region
    $region53: #{attention_residual_block.1} parent=5 // pred_check
      %p1913 = pneg %p1912
    $region54: #{attention_residual_block.1} parent=5 // pred_check_branch
      %1915 = sbr.rel (%p1913) target = $region56
    $region55: #{attention_residual_block.1} parent=5 // pred_region
      %s1916 = ssub.s32 %s13, 2
      // Predicated region
      $region57: #{attention_residual_block.1} parent=55 // pred_check
        %p1917 = pneg %p194
      $region58: #{attention_residual_block.1} parent=55 // pred_check_branch
        %1919 = sbr.rel (%p1917) target = $region60
      $region59: #{attention_residual_block.1} parent=55 // pred_region
        %p1920 = scmp.lt.s32.totalorder %s19, 1
        %s1921 = scalar_select %p1920, %s19, 1
        %s1922 = smul.addr %s1921, 4
        %s1923 = smul.addr %s1922, 8
        %s1924 = scalar_lea.vmem %s7, %s1923
      $region60: #{attention_residual_block.1} parent=55 // pred_fallthru
        _
    $region56: #{attention_residual_block.1} parent=5 // pred_fallthru
      _
  $region6: #{attention_residual_block.1} parent=0 // loop_footer
    %s17 = sadd.s32 1, %s13
  $region7: #{attention_residual_block.1} parent=0 // loop_footer_branch
    %12 = sbr.rel target = $region3
  $region8: #{attention_residual_block.1} parent=0 // loop_exit
    _

</llo_original>
